<compile_context>
chip_gen: v5e
topology: v5e:2x2
jax: 0.10.0
libtpu: 0.0.40
codegen_flags: <defaults>
</compile_context>

<pallas_src>
import functools

import jax
import jax.numpy as jnp
from jax import lax
from jax.experimental import pallas as pl
from jax.experimental.pallas import tpu as pltpu


# ----------------------------------------------------------------------------
# in-kernel helpers (EUP reciprocal keeps the divides off the VPU slot)
# ----------------------------------------------------------------------------
def _silu(x):
    return x * pl.reciprocal(1.0 + jnp.exp(-x), approx=True)


def _softmax_last(x):
    m = jnp.max(x, axis=-1, keepdims=True)
    e = jnp.exp(x - m)
    return e * pl.reciprocal(jnp.sum(e, axis=-1, keepdims=True), approx=True)


# ----------------------------------------------------------------------------
# The fused kernel (single invocation, no grid)
# ----------------------------------------------------------------------------
def fused_block_cs_ann_kernel(
    x_ref,        # VMEM (B, C, H2, 2W)  input, H rows folded pairwise onto lanes
    g_ref,        # SMEM (C,)            BN gamma
    bt_ref,       # SMEM (C,)            BN beta
    wc_ref,       # VMEM (W, F)          channel-attention 1x1 conv weight (transposed)
    pw_ref,       # VMEM (5, F, F)       [ca_lin1, ca_lin2, sal_q, sal_k, sal_v] (transposed)
    pb_ref,       # VMEM (6, F)          [ca_conv_b, ca_lin1_b, ca_lin2_b, sal_bq, sal_bk, sal_bv]
    wp_ref,       # VMEM (M, M)          sal weights_parameter rearranged so out = wp2 @ qkv
    cqw_ref,      # SMEM (3, C2)         spatial-conv q/k/v 1x1 conv weights
    cqb_ref,      # SMEM (3,)            spatial-conv q/k/v biases
    cow_ref,      # SMEM (C2,)           spatial-conv output 1x1 conv weight
    cob_ref,      # SMEM (C2,)           spatial-conv output bias
    o_ref,        # VMEM (B, M, F)       output
    *, B, C2, H2, W, F,
):
    del F  # shapes are taken from the refs
    C = 2 * C2
    M = C2 * H2

    x = x_ref[...]                                            # (B, C, H2, 2W)

    # ---- BatchNorm2d (training-mode batch stats, biased var) -> per-channel scale/shift
    scale = []
    shift = []
    for c in range(C):
        xc = x[:, c].reshape(B * H2, 2 * W)                   # all of (B, H, W) for channel c
        m = jnp.mean(xc, keepdims=True)                       # (1, 1)
        v = jnp.mean(jnp.square(xc - m), keepdims=True)       # (1, 1) biased variance
        g_c = lax.rsqrt(v + 1e-5) * g_ref[c]
        scale.append(g_c)
        shift.append(bt_ref[c] - m * g_c)

    # ---- BN + SiLU + MaxPool2d((2,2)) over (C, H); rows assembled (b, c2, h2)-major
    rows = []
    for b in range(B):
        for c2 in range(C2):
            c0, c1 = 2 * c2, 2 * c2 + 1
            y0 = _silu(x[b, c0] * scale[c0] + shift[c0])      # (H2, 2W)
            y1 = _silu(x[b, c1] * scale[c1] + shift[c1])      # (H2, 2W)
            pc = jnp.maximum(y0, y1)                          # pooled over the channel pair
            rows.append(jnp.maximum(pc[:, :W], pc[:, W:]))    # pooled over the H pair -> (H2, W)
    xr = jnp.concatenate(rows, axis=0)                        # (B*M, W)

    # ---- ChannelAttention: 1x1 conv over W == one batch-folded matmul
    pb = pb_ref[...]                                          # (6, F)
    y = jnp.dot(xr, wc_ref[...], preferred_element_type=jnp.float32) + pb[0:1]   # (B*M, F)

    z_mx = jnp.concatenate(
        [jnp.max(y[b * M:(b + 1) * M], axis=0, keepdims=True) for b in range(B)], axis=0)   # (B, F)
    z_mn = jnp.concatenate(
        [jnp.mean(y[b * M:(b + 1) * M], axis=0, keepdims=True) for b in range(B)], axis=0)  # (B, F)
    z1 = jnp.dot(z_mx, pw_ref[0, :, :], preferred_element_type=jnp.float32) + pb[1:2]
    z2 = jnp.dot(z_mn, pw_ref[1, :, :], preferred_element_type=jnp.float32) + pb[2:3]
    zf = _softmax_last(z1 + z2)                               # (B, F) gating

    x_ca = jnp.concatenate(
        [y[b * M:(b + 1) * M] * zf[b:b + 1, :] for b in range(B)], axis=0)       # (B*M, F)

    # ---- SpatialAttentionLinear projections (batch folded into M)
    q2 = jnp.dot(x_ca, pw_ref[2, :, :], preferred_element_type=jnp.float32) + pb[3:4]
    k2 = jnp.dot(x_ca, pw_ref[3, :, :], preferred_element_type=jnp.float32) + pb[4:5]
    v2 = jnp.dot(x_ca, pw_ref[4, :, :], preferred_element_type=jnp.float32) + pb[5:6]

    wp2 = wp_ref[...]                                         # (M, M)

    # ---- per-batch attention (M x M and H2 x H2) + combine; B is tiny -> static unroll
    for b in range(B):
        lo, hi = b * M, (b + 1) * M
        qb, kb, vb, xb = q2[lo:hi], k2[lo:hi], v2[lo:hi], x_ca[lo:hi]            # (M, F)

        # linear branch
        scores = lax.dot_general(qb, kb, (((1,), (1,)), ((), ())),
                                 preferred_element_type=jnp.float32)            # (M, M)
        qkv = jnp.dot(_softmax_last(scores), vb,
                      preferred_element_type=jnp.float32)                       # (M, F)
        z_lin = jnp.dot(wp2, qkv, preferred_element_type=jnp.float32)           # (M, F)

        # convolution branch: 1x1 convs (C2 -> 1) over the channel groups of xb's rows
        blocks = [xb[c * H2:(c + 1) * H2] for c in range(C2)]                    # (H2, F) each
        qc = sum(cqw_ref[0, c] * blocks[c] for c in range(C2)) + cqb_ref[0]
        kc = sum(cqw_ref[1, c] * blocks[c] for c in range(C2)) + cqb_ref[1]
        vc = sum(cqw_ref[2, c] * blocks[c] for c in range(C2)) + cqb_ref[2]
        scores_c = lax.dot_general(qc, kc, (((1,), (1,)), ((), ())),
                                   preferred_element_type=jnp.float32)          # (H2, H2)
        qkv_c = jnp.dot(_softmax_last(scores_c), vc,
                        preferred_element_type=jnp.float32)                     # (H2, F)
        z_conv = jnp.concatenate(
            [cow_ref[c] * qkv_c + cob_ref[c] for c in range(C2)], axis=0)        # (M, F)

        o_ref[b, :, :] = (z_lin + z_conv) * xb


# ----------------------------------------------------------------------------
# Wrapper
# ----------------------------------------------------------------------------
def block_cs_ann_forward(x, pp):
    B, C, H, W = x.shape
    C2, H2 = C // 2, H // 2
    F = pp["proj_b"].shape[1]
    M = C2 * H2

    kernel = functools.partial(fused_block_cs_ann_kernel, B=B, C2=C2, H2=H2, W=W, F=F)
    vmem = lambda: pl.BlockSpec(memory_space=pltpu.MemorySpace.VMEM)
    smem = lambda: pl.BlockSpec(memory_space=pltpu.MemorySpace.SMEM)

    out = pl.pallas_call(
        kernel,
        out_shape=jax.ShapeDtypeStruct((B, M, F), jnp.float32),
        in_specs=[vmem(), smem(), smem(), vmem(), vmem(), vmem(), vmem(),
                  smem(), smem(), smem(), smem()],
        out_specs=vmem(),
    )(
        x.reshape(B, C, H2, 2 * W),      # fold H pairs onto lanes (free row-major reshape)
        pp["bn_gamma"], pp["bn_beta"],
        pp["ca_conv_wt"], pp["proj_w"], pp["proj_b"], pp["sal_wp2"],
        pp["sac_qkv_w"], pp["sac_qkv_b"], pp["sac_out_w"], pp["sac_out_b"],
    )
    return out.reshape(B, C2, H2, F)


def prepare_params(p):
    """One-time (outside jit) weight layout prep: transposes / stacking."""
    C2, N, H2 = p["sal_wp"].shape
    return {
        "bn_gamma": p["bn_gamma"],
        "bn_beta": p["bn_beta"],
        "ca_conv_wt": jnp.transpose(p["ca_conv_w"]),                               # (W, F)
        "proj_w": jnp.stack([p["ca_lin1_w"].T, p["ca_lin2_w"].T,
                             p["sal_wq"].T, p["sal_wk"].T, p["sal_wv"].T], axis=0),  # (5, F, F)
        "proj_b": jnp.stack([p["ca_conv_b"], p["ca_lin1_b"], p["ca_lin2_b"],
                             p["sal_bq"], p["sal_bk"], p["sal_bv"]], axis=0),        # (6, F)
        "sal_wp2": jnp.transpose(p["sal_wp"], (0, 2, 1)).reshape(C2 * H2, N),        # (N, N)
        "sac_qkv_w": jnp.stack([p["sac_wq"], p["sac_wk"], p["sac_wv"]], axis=0),     # (3, C2)
        "sac_qkv_b": jnp.concatenate([p["sac_bq"], p["sac_bk"], p["sac_bv"]]),       # (3,)
        "sac_out_w": p["sac_w2"],                                                    # (C2,)
        "sac_out_b": p["sac_b2"],                                                    # (C2,)
    }


# ----------------------------------------------------------------------------
# Pure-JAX reference of the torch forward (for a numerical self-check)
# ----------------------------------------------------------------------------
def reference_forward(x, p):
    hi = lax.Precision.HIGHEST
    B, C, H, W = x.shape
    C2, H2 = C // 2, H // 2
    N = C2 * H2
    F = p["ca_conv_w"].shape[0]

    mean = jnp.mean(x, axis=(0, 2, 3), keepdims=True)
    var = jnp.mean(jnp.square(x - mean), axis=(0, 2, 3), keepdims=True)
    y = (x - mean) / jnp.sqrt(var + 1e-5)
    y = y * p["bn_gamma"].reshape(1, C, 1, 1) + p["bn_beta"].reshape(1, C, 1, 1)
    y = y * jax.nn.sigmoid(y)
    y = y.reshape(B, C2, 2, H2, 2, W).max(axis=(2, 4))                           # (B, C2, H2, W)

    yc = jnp.einsum("bchw,fw->bchf", y, p["ca_conv_w"], precision=hi) + p["ca_conv_b"]
    z_max = jnp.max(yc, axis=(1, 2))
    z_mean = jnp.mean(yc, axis=(1, 2))
    z1 = jnp.einsum("bf,gf->bg", z_max, p["ca_lin1_w"], precision=hi) + p["ca_lin1_b"]
    z2 = jnp.einsum("bf,gf->bg", z_mean, p["ca_lin2_w"], precision=hi) + p["ca_lin2_b"]
    zf = jax.nn.softmax(z1 + z2, axis=-1)
    x_ca = yc * zf[:, None, None, :]                                             # (B, C2, H2, F)

    q = jnp.einsum("bchf,gf->bchg", x_ca, p["sal_wq"], precision=hi) + p["sal_bq"]
    k = jnp.einsum("bchf,gf->bchg", x_ca, p["sal_wk"], precision=hi) + p["sal_bk"]
    v = jnp.einsum("bchf,gf->bchg", x_ca, p["sal_wv"], precision=hi) + p["sal_bv"]
    q, k, v = (t.reshape(B, N, F) for t in (q, k, v))
    attn = jax.nn.softmax(jnp.einsum("bnf,bmf->bnm", q, k, precision=hi), axis=-1)
    qkv = jnp.einsum("bnm,bmf->bnf", attn, v, precision=hi)
    z_lin = jnp.einsum("bnf,cnh->bchf", qkv, p["sal_wp"], precision=hi)          # (B, C2, H2, F)

    qc = jnp.einsum("c,bchf->bhf", p["sac_wq"], x_ca, precision=hi) + p["sac_bq"][0]
    kc = jnp.einsum("c,bchf->bhf", p["sac_wk"], x_ca, precision=hi) + p["sac_bk"][0]
    vc = jnp.einsum("c,bchf->bhf", p["sac_wv"], x_ca, precision=hi) + p["sac_bv"][0]
    attn_c = jax.nn.softmax(jnp.einsum("bhf,bgf->bhg", qc, kc, precision=hi), axis=-1)
    qkv_c = jnp.einsum("bhg,bgf->bhf", attn_c, vc, precision=hi)                 # (B, H2, F)
    z_conv = (p["sac_w2"][None, :, None, None] * qkv_c[:, None, :, :]
              + p["sac_b2"][None, :, None, None])                                # (B, C2, H2, F)

    return (z_lin + z_conv) * x_ca


# ----------------------------------------------------------------------------
# Deterministic parameter init (synthetic; shapes follow the torch module)
# ----------------------------------------------------------------------------
def init_params(key, C, H, W, nb_features=32):
    C2, H2 = C // 2, H // 2
    ks = jax.random.split(key, 24)
    rnd = lambda k, shape, s=0.1: s * jax.random.normal(k, shape, jnp.float32)
    F = nb_features
    return {
        # BatchNorm2d(C)
        "bn_gamma": 1.0 + rnd(ks[0], (C,)),
        "bn_beta": rnd(ks[1], (C,)),
        # ChannelAttention: LazyConv2d(F,1) with in_channels=W, Linear(F,F) x2
        "ca_conv_w": rnd(ks[2], (F, W)),
        "ca_conv_b": rnd(ks[3], (F,)),
        "ca_lin1_w": rnd(ks[4], (F, F)),
        "ca_lin1_b": rnd(ks[5], (F,)),
        "ca_lin2_w": rnd(ks[6], (F, F)),
        "ca_lin2_b": rnd(ks[7], (F,)),
        # SpatialAttentionLinear: LazyLinear(F) x3, weights_parameter (C2, C2*H2, H2)
        "sal_wq": rnd(ks[8], (F, F)),  "sal_bq": rnd(ks[9], (F,)),
        "sal_wk": rnd(ks[10], (F, F)), "sal_bk": rnd(ks[11], (F,)),
        "sal_wv": rnd(ks[12], (F, F)), "sal_bv": rnd(ks[13], (F,)),
        "sal_wp": rnd(ks[14], (C2, C2 * H2, H2), 0.1),
        # SpatialAttentionConvolution: LazyConv2d(1,1) x3 (in=C2), LazyConv2d(C2,1) (in=1)
        "sac_wq": rnd(ks[15], (C2,)), "sac_bq": rnd(ks[16], (1,)),
        "sac_wk": rnd(ks[17], (C2,)), "sac_bk": rnd(ks[18], (1,)),
        "sac_wv": rnd(ks[19], (C2,)), "sac_bv": rnd(ks[20], (1,)),
        "sac_w2": rnd(ks[21], (C2,)), "sac_b2": rnd(ks[22], (C2,)),
    }


if __name__ == "__main__":
    key = jax.random.PRNGKey(0)
    kx, kp = jax.random.split(key)
    B, C, H, W = 2, 4, 16, 16
    NB_FEATURES = 32
    x = jax.random.normal(kx, (B, C, H, W), jnp.float32)
    params = init_params(kp, C, H, W, nb_features=NB_FEATURES)
    pp = prepare_params(params)          # one-time weight layout prep (outside jit)

    fwd = jax.jit(block_cs_ann_forward)
    out = jax.block_until_ready(fwd(x, pp))

    assert out.shape == (B, C // 2, H // 2, NB_FEATURES), out.shape
    assert bool(jnp.all(jnp.isfinite(out)))

    # numerical self-check against a pure-JAX reference of the torch forward
    ref = reference_forward(x, params)
    err = float(jnp.max(jnp.abs(out - ref)))
    den = float(jnp.max(jnp.abs(ref))) + 1e-12
    assert err / den < 5e-2, ("kernel/reference mismatch", err, den)

    print("KERNEL_OK")
</pallas_src>

<mosaic_0001>
module attributes {stable_mosaic.version = 11 : i64} {
  func.func @fused_block_cs_ann_kernel(%arg0: memref<2x4x8x32xf32, #tpu.memory_space<vmem>>, %arg1: memref<4xf32, #tpu.memory_space<smem>>, %arg2: memref<4xf32, #tpu.memory_space<smem>>, %arg3: memref<16x32xf32, #tpu.memory_space<vmem>>, %arg4: memref<5x32x32xf32, #tpu.memory_space<vmem>>, %arg5: memref<6x32xf32, #tpu.memory_space<vmem>>, %arg6: memref<16x16xf32, #tpu.memory_space<vmem>>, %arg7: memref<3x2xf32, #tpu.memory_space<smem>>, %arg8: memref<3xf32, #tpu.memory_space<smem>>, %arg9: memref<2xf32, #tpu.memory_space<smem>>, %arg10: memref<2xf32, #tpu.memory_space<smem>>, %arg11: memref<2x16x32xf32, #tpu.memory_space<vmem>>) attributes {dimension_semantics = [], scalar_prefetch = 0 : i64, scratch_operands = 0 : i64, tpu.core_type = #tpu.core_type<tc>} {
    %c0 = arith.constant 0 : index
    %c0_0 = arith.constant 0 : index
    %c0_1 = arith.constant 0 : index
    %c0_2 = arith.constant 0 : index
    %0 = vector.load %arg0[%c0, %c0_0, %c0_1, %c0_2] : memref<2x4x8x32xf32, #tpu.memory_space<vmem>>, vector<2x4x8x32xf32>
    %1 = vector.extract_strided_slice %0 {offsets = [0, 0, 0, 0], sizes = [2, 1, 8, 32], strides = [1, 1, 1, 1]} : vector<2x4x8x32xf32> to vector<2x1x8x32xf32>
    %2 = vector.shape_cast %1 : vector<2x1x8x32xf32> to vector<2x8x32xf32>
    %3 = vector.shape_cast %2 : vector<2x8x32xf32> to vector<16x32xf32>
    %4 = vector.shape_cast %3 : vector<16x32xf32> to vector<1x16x32xf32>
    %cst = arith.constant dense<0.000000e+00> : vector<1xf32>
    %5 = vector.multi_reduction <add>, %4, %cst [1, 2] : vector<1x16x32xf32> to vector<1xf32>
    %6 = vector.shape_cast %5 : vector<1xf32> to vector<1x1x1xf32>
    %7 = vector.extract %6[0, 0, 0] : f32 from vector<1x1x1xf32>
    %8 = vector.broadcast %7 : f32 to vector<1x1xf32>
    %cst_3 = arith.constant 5.120000e+02 : f32
    %9 = vector.broadcast %cst_3 : f32 to vector<1x1xf32>
    %10 = arith.divf %8, %9 : vector<1x1xf32>
    %11 = vector.broadcast %10 : vector<1x1xf32> to vector<16x32xf32>
    %12 = arith.subf %3, %11 : vector<16x32xf32>
    %13 = arith.mulf %12, %12 : vector<16x32xf32>
    %14 = vector.shape_cast %13 : vector<16x32xf32> to vector<1x16x32xf32>
    %cst_4 = arith.constant dense<0.000000e+00> : vector<1xf32>
    %15 = vector.multi_reduction <add>, %14, %cst_4 [1, 2] : vector<1x16x32xf32> to vector<1xf32>
    %16 = vector.shape_cast %15 : vector<1xf32> to vector<1x1x1xf32>
    %17 = vector.extract %16[0, 0, 0] : f32 from vector<1x1x1xf32>
    %18 = vector.broadcast %17 : f32 to vector<1x1xf32>
    %cst_5 = arith.constant 5.120000e+02 : f32
    %19 = vector.broadcast %cst_5 : f32 to vector<1x1xf32>
    %20 = arith.divf %18, %19 : vector<1x1xf32>
    %cst_6 = arith.constant 9.99999974E-6 : f32
    %21 = vector.broadcast %cst_6 : f32 to vector<1x1xf32>
    %22 = arith.addf %20, %21 : vector<1x1xf32>
    %23 = math.rsqrt %22 : vector<1x1xf32>
    %c0_7 = arith.constant 0 : index
    %24 = memref.load %arg1[%c0_7] : memref<4xf32, #tpu.memory_space<smem>>
    %25 = vector.broadcast %24 : f32 to vector<1x1xf32>
    %26 = arith.mulf %23, %25 : vector<1x1xf32>
    %c0_8 = arith.constant 0 : index
    %27 = memref.load %arg2[%c0_8] : memref<4xf32, #tpu.memory_space<smem>>
    %28 = arith.mulf %10, %26 : vector<1x1xf32>
    %29 = vector.broadcast %27 : f32 to vector<1x1xf32>
    %30 = arith.subf %29, %28 : vector<1x1xf32>
    %31 = vector.extract_strided_slice %0 {offsets = [0, 1, 0, 0], sizes = [2, 1, 8, 32], strides = [1, 1, 1, 1]} : vector<2x4x8x32xf32> to vector<2x1x8x32xf32>
    %32 = vector.shape_cast %31 : vector<2x1x8x32xf32> to vector<2x8x32xf32>
    %33 = vector.shape_cast %32 : vector<2x8x32xf32> to vector<16x32xf32>
    %34 = vector.shape_cast %33 : vector<16x32xf32> to vector<1x16x32xf32>
    %cst_9 = arith.constant dense<0.000000e+00> : vector<1xf32>
    %35 = vector.multi_reduction <add>, %34, %cst_9 [1, 2] : vector<1x16x32xf32> to vector<1xf32>
    %36 = vector.shape_cast %35 : vector<1xf32> to vector<1x1x1xf32>
    %37 = vector.extract %36[0, 0, 0] : f32 from vector<1x1x1xf32>
    %38 = vector.broadcast %37 : f32 to vector<1x1xf32>
    %cst_10 = arith.constant 5.120000e+02 : f32
    %39 = vector.broadcast %cst_10 : f32 to vector<1x1xf32>
    %40 = arith.divf %38, %39 : vector<1x1xf32>
    %41 = vector.broadcast %40 : vector<1x1xf32> to vector<16x32xf32>
    %42 = arith.subf %33, %41 : vector<16x32xf32>
    %43 = arith.mulf %42, %42 : vector<16x32xf32>
    %44 = vector.shape_cast %43 : vector<16x32xf32> to vector<1x16x32xf32>
    %cst_11 = arith.constant dense<0.000000e+00> : vector<1xf32>
    %45 = vector.multi_reduction <add>, %44, %cst_11 [1, 2] : vector<1x16x32xf32> to vector<1xf32>
    %46 = vector.shape_cast %45 : vector<1xf32> to vector<1x1x1xf32>
    %47 = vector.extract %46[0, 0, 0] : f32 from vector<1x1x1xf32>
    %48 = vector.broadcast %47 : f32 to vector<1x1xf32>
    %cst_12 = arith.constant 5.120000e+02 : f32
    %49 = vector.broadcast %cst_12 : f32 to vector<1x1xf32>
    %50 = arith.divf %48, %49 : vector<1x1xf32>
    %cst_13 = arith.constant 9.99999974E-6 : f32
    %51 = vector.broadcast %cst_13 : f32 to vector<1x1xf32>
    %52 = arith.addf %50, %51 : vector<1x1xf32>
    %53 = math.rsqrt %52 : vector<1x1xf32>
    %c1 = arith.constant 1 : index
    %54 = memref.load %arg1[%c1] : memref<4xf32, #tpu.memory_space<smem>>
    %55 = vector.broadcast %54 : f32 to vector<1x1xf32>
    %56 = arith.mulf %53, %55 : vector<1x1xf32>
    %c1_14 = arith.constant 1 : index
    %57 = memref.load %arg2[%c1_14] : memref<4xf32, #tpu.memory_space<smem>>
    %58 = arith.mulf %40, %56 : vector<1x1xf32>
    %59 = vector.broadcast %57 : f32 to vector<1x1xf32>
    %60 = arith.subf %59, %58 : vector<1x1xf32>
    %61 = vector.extract_strided_slice %0 {offsets = [0, 2, 0, 0], sizes = [2, 1, 8, 32], strides = [1, 1, 1, 1]} : vector<2x4x8x32xf32> to vector<2x1x8x32xf32>
    %62 = vector.shape_cast %61 : vector<2x1x8x32xf32> to vector<2x8x32xf32>
    %63 = vector.shape_cast %62 : vector<2x8x32xf32> to vector<16x32xf32>
    %64 = vector.shape_cast %63 : vector<16x32xf32> to vector<1x16x32xf32>
    %cst_15 = arith.constant dense<0.000000e+00> : vector<1xf32>
    %65 = vector.multi_reduction <add>, %64, %cst_15 [1, 2] : vector<1x16x32xf32> to vector<1xf32>
    %66 = vector.shape_cast %65 : vector<1xf32> to vector<1x1x1xf32>
    %67 = vector.extract %66[0, 0, 0] : f32 from vector<1x1x1xf32>
    %68 = vector.broadcast %67 : f32 to vector<1x1xf32>
    %cst_16 = arith.constant 5.120000e+02 : f32
    %69 = vector.broadcast %cst_16 : f32 to vector<1x1xf32>
    %70 = arith.divf %68, %69 : vector<1x1xf32>
    %71 = vector.broadcast %70 : vector<1x1xf32> to vector<16x32xf32>
    %72 = arith.subf %63, %71 : vector<16x32xf32>
    %73 = arith.mulf %72, %72 : vector<16x32xf32>
    %74 = vector.shape_cast %73 : vector<16x32xf32> to vector<1x16x32xf32>
    %cst_17 = arith.constant dense<0.000000e+00> : vector<1xf32>
    %75 = vector.multi_reduction <add>, %74, %cst_17 [1, 2] : vector<1x16x32xf32> to vector<1xf32>
    %76 = vector.shape_cast %75 : vector<1xf32> to vector<1x1x1xf32>
    %77 = vector.extract %76[0, 0, 0] : f32 from vector<1x1x1xf32>
    %78 = vector.broadcast %77 : f32 to vector<1x1xf32>
    %cst_18 = arith.constant 5.120000e+02 : f32
    %79 = vector.broadcast %cst_18 : f32 to vector<1x1xf32>
    %80 = arith.divf %78, %79 : vector<1x1xf32>
    %cst_19 = arith.constant 9.99999974E-6 : f32
    %81 = vector.broadcast %cst_19 : f32 to vector<1x1xf32>
    %82 = arith.addf %80, %81 : vector<1x1xf32>
    %83 = math.rsqrt %82 : vector<1x1xf32>
    %c2 = arith.constant 2 : index
    %84 = memref.load %arg1[%c2] : memref<4xf32, #tpu.memory_space<smem>>
    %85 = vector.broadcast %84 : f32 to vector<1x1xf32>
    %86 = arith.mulf %83, %85 : vector<1x1xf32>
    %c2_20 = arith.constant 2 : index
    %87 = memref.load %arg2[%c2_20] : memref<4xf32, #tpu.memory_space<smem>>
    %88 = arith.mulf %70, %86 : vector<1x1xf32>
    %89 = vector.broadcast %87 : f32 to vector<1x1xf32>
    %90 = arith.subf %89, %88 : vector<1x1xf32>
    %91 = vector.extract_strided_slice %0 {offsets = [0, 3, 0, 0], sizes = [2, 1, 8, 32], strides = [1, 1, 1, 1]} : vector<2x4x8x32xf32> to vector<2x1x8x32xf32>
    %92 = vector.shape_cast %91 : vector<2x1x8x32xf32> to vector<2x8x32xf32>
    %93 = vector.shape_cast %92 : vector<2x8x32xf32> to vector<16x32xf32>
    %94 = vector.shape_cast %93 : vector<16x32xf32> to vector<1x16x32xf32>
    %cst_21 = arith.constant dense<0.000000e+00> : vector<1xf32>
    %95 = vector.multi_reduction <add>, %94, %cst_21 [1, 2] : vector<1x16x32xf32> to vector<1xf32>
    %96 = vector.shape_cast %95 : vector<1xf32> to vector<1x1x1xf32>
    %97 = vector.extract %96[0, 0, 0] : f32 from vector<1x1x1xf32>
    %98 = vector.broadcast %97 : f32 to vector<1x1xf32>
    %cst_22 = arith.constant 5.120000e+02 : f32
    %99 = vector.broadcast %cst_22 : f32 to vector<1x1xf32>
    %100 = arith.divf %98, %99 : vector<1x1xf32>
    %101 = vector.broadcast %100 : vector<1x1xf32> to vector<16x32xf32>
    %102 = arith.subf %93, %101 : vector<16x32xf32>
    %103 = arith.mulf %102, %102 : vector<16x32xf32>
    %104 = vector.shape_cast %103 : vector<16x32xf32> to vector<1x16x32xf32>
    %cst_23 = arith.constant dense<0.000000e+00> : vector<1xf32>
    %105 = vector.multi_reduction <add>, %104, %cst_23 [1, 2] : vector<1x16x32xf32> to vector<1xf32>
    %106 = vector.shape_cast %105 : vector<1xf32> to vector<1x1x1xf32>
    %107 = vector.extract %106[0, 0, 0] : f32 from vector<1x1x1xf32>
    %108 = vector.broadcast %107 : f32 to vector<1x1xf32>
    %cst_24 = arith.constant 5.120000e+02 : f32
    %109 = vector.broadcast %cst_24 : f32 to vector<1x1xf32>
    %110 = arith.divf %108, %109 : vector<1x1xf32>
    %cst_25 = arith.constant 9.99999974E-6 : f32
    %111 = vector.broadcast %cst_25 : f32 to vector<1x1xf32>
    %112 = arith.addf %110, %111 : vector<1x1xf32>
    %113 = math.rsqrt %112 : vector<1x1xf32>
    %c3 = arith.constant 3 : index
    %114 = memref.load %arg1[%c3] : memref<4xf32, #tpu.memory_space<smem>>
    %115 = vector.broadcast %114 : f32 to vector<1x1xf32>
    %116 = arith.mulf %113, %115 : vector<1x1xf32>
    %c3_26 = arith.constant 3 : index
    %117 = memref.load %arg2[%c3_26] : memref<4xf32, #tpu.memory_space<smem>>
    %118 = arith.mulf %100, %116 : vector<1x1xf32>
    %119 = vector.broadcast %117 : f32 to vector<1x1xf32>
    %120 = arith.subf %119, %118 : vector<1x1xf32>
    %121 = vector.extract_strided_slice %0 {offsets = [0, 0, 0, 0], sizes = [1, 1, 8, 32], strides = [1, 1, 1, 1]} : vector<2x4x8x32xf32> to vector<1x1x8x32xf32>
    %122 = vector.shape_cast %121 : vector<1x1x8x32xf32> to vector<8x32xf32>
    %123 = vector.broadcast %26 : vector<1x1xf32> to vector<8x32xf32>
    %124 = arith.mulf %122, %123 : vector<8x32xf32>
    %125 = vector.broadcast %30 : vector<1x1xf32> to vector<8x32xf32>
    %126 = arith.addf %124, %125 : vector<8x32xf32>
    %cst_27 = arith.constant 0.000000e+00 : f32
    %127 = vector.broadcast %cst_27 : f32 to vector<8x32xf32>
    %128 = arith.subf %127, %126 : vector<8x32xf32>
    %129 = math.exp %128 : vector<8x32xf32>
    %cst_28 = arith.constant 1.000000e+00 : f32
    %130 = vector.broadcast %cst_28 : f32 to vector<8x32xf32>
    %131 = arith.addf %130, %129 : vector<8x32xf32>
    %132 = tpu.reciprocal %131 {approx = true} : vector<8x32xf32> -> vector<8x32xf32>
    %133 = arith.mulf %126, %132 : vector<8x32xf32>
    %134 = vector.extract_strided_slice %0 {offsets = [0, 1, 0, 0], sizes = [1, 1, 8, 32], strides = [1, 1, 1, 1]} : vector<2x4x8x32xf32> to vector<1x1x8x32xf32>
    %135 = vector.shape_cast %134 : vector<1x1x8x32xf32> to vector<8x32xf32>
    %136 = vector.broadcast %56 : vector<1x1xf32> to vector<8x32xf32>
    %137 = arith.mulf %135, %136 : vector<8x32xf32>
    %138 = vector.broadcast %60 : vector<1x1xf32> to vector<8x32xf32>
    %139 = arith.addf %137, %138 : vector<8x32xf32>
    %cst_29 = arith.constant 0.000000e+00 : f32
    %140 = vector.broadcast %cst_29 : f32 to vector<8x32xf32>
    %141 = arith.subf %140, %139 : vector<8x32xf32>
    %142 = math.exp %141 : vector<8x32xf32>
    %cst_30 = arith.constant 1.000000e+00 : f32
    %143 = vector.broadcast %cst_30 : f32 to vector<8x32xf32>
    %144 = arith.addf %143, %142 : vector<8x32xf32>
    %145 = tpu.reciprocal %144 {approx = true} : vector<8x32xf32> -> vector<8x32xf32>
    %146 = arith.mulf %139, %145 : vector<8x32xf32>
    %147 = arith.maximumf %133, %146 : vector<8x32xf32>
    %148 = vector.extract_strided_slice %147 {offsets = [0, 0], sizes = [8, 16], strides = [1, 1]} : vector<8x32xf32> to vector<8x16xf32>
    %149 = vector.extract_strided_slice %147 {offsets = [0, 16], sizes = [8, 16], strides = [1, 1]} : vector<8x32xf32> to vector<8x16xf32>
    %150 = arith.maximumf %148, %149 : vector<8x16xf32>
    %151 = vector.extract_strided_slice %0 {offsets = [0, 2, 0, 0], sizes = [1, 1, 8, 32], strides = [1, 1, 1, 1]} : vector<2x4x8x32xf32> to vector<1x1x8x32xf32>
    %152 = vector.shape_cast %151 : vector<1x1x8x32xf32> to vector<8x32xf32>
    %153 = vector.broadcast %86 : vector<1x1xf32> to vector<8x32xf32>
    %154 = arith.mulf %152, %153 : vector<8x32xf32>
    %155 = vector.broadcast %90 : vector<1x1xf32> to vector<8x32xf32>
    %156 = arith.addf %154, %155 : vector<8x32xf32>
    %cst_31 = arith.constant 0.000000e+00 : f32
    %157 = vector.broadcast %cst_31 : f32 to vector<8x32xf32>
    %158 = arith.subf %157, %156 : vector<8x32xf32>
    %159 = math.exp %158 : vector<8x32xf32>
    %cst_32 = arith.constant 1.000000e+00 : f32
    %160 = vector.broadcast %cst_32 : f32 to vector<8x32xf32>
    %161 = arith.addf %160, %159 : vector<8x32xf32>
    %162 = tpu.reciprocal %161 {approx = true} : vector<8x32xf32> -> vector<8x32xf32>
    %163 = arith.mulf %156, %162 : vector<8x32xf32>
    %164 = vector.extract_strided_slice %0 {offsets = [0, 3, 0, 0], sizes = [1, 1, 8, 32], strides = [1, 1, 1, 1]} : vector<2x4x8x32xf32> to vector<1x1x8x32xf32>
    %165 = vector.shape_cast %164 : vector<1x1x8x32xf32> to vector<8x32xf32>
    %166 = vector.broadcast %116 : vector<1x1xf32> to vector<8x32xf32>
    %167 = arith.mulf %165, %166 : vector<8x32xf32>
    %168 = vector.broadcast %120 : vector<1x1xf32> to vector<8x32xf32>
    %169 = arith.addf %167, %168 : vector<8x32xf32>
    %cst_33 = arith.constant 0.000000e+00 : f32
    %170 = vector.broadcast %cst_33 : f32 to vector<8x32xf32>
    %171 = arith.subf %170, %169 : vector<8x32xf32>
    %172 = math.exp %171 : vector<8x32xf32>
    %cst_34 = arith.constant 1.000000e+00 : f32
    %173 = vector.broadcast %cst_34 : f32 to vector<8x32xf32>
    %174 = arith.addf %173, %172 : vector<8x32xf32>
    %175 = tpu.reciprocal %174 {approx = true} : vector<8x32xf32> -> vector<8x32xf32>
    %176 = arith.mulf %169, %175 : vector<8x32xf32>
    %177 = arith.maximumf %163, %176 : vector<8x32xf32>
    %178 = vector.extract_strided_slice %177 {offsets = [0, 0], sizes = [8, 16], strides = [1, 1]} : vector<8x32xf32> to vector<8x16xf32>
    %179 = vector.extract_strided_slice %177 {offsets = [0, 16], sizes = [8, 16], strides = [1, 1]} : vector<8x32xf32> to vector<8x16xf32>
    %180 = arith.maximumf %178, %179 : vector<8x16xf32>
    %181 = vector.extract_strided_slice %0 {offsets = [1, 0, 0, 0], sizes = [1, 1, 8, 32], strides = [1, 1, 1, 1]} : vector<2x4x8x32xf32> to vector<1x1x8x32xf32>
    %182 = vector.shape_cast %181 : vector<1x1x8x32xf32> to vector<8x32xf32>
    %183 = vector.broadcast %26 : vector<1x1xf32> to vector<8x32xf32>
    %184 = arith.mulf %182, %183 : vector<8x32xf32>
    %185 = vector.broadcast %30 : vector<1x1xf32> to vector<8x32xf32>
    %186 = arith.addf %184, %185 : vector<8x32xf32>
    %cst_35 = arith.constant 0.000000e+00 : f32
    %187 = vector.broadcast %cst_35 : f32 to vector<8x32xf32>
    %188 = arith.subf %187, %186 : vector<8x32xf32>
    %189 = math.exp %188 : vector<8x32xf32>
    %cst_36 = arith.constant 1.000000e+00 : f32
    %190 = vector.broadcast %cst_36 : f32 to vector<8x32xf32>
    %191 = arith.addf %190, %189 : vector<8x32xf32>
    %192 = tpu.reciprocal %191 {approx = true} : vector<8x32xf32> -> vector<8x32xf32>
    %193 = arith.mulf %186, %192 : vector<8x32xf32>
    %194 = vector.extract_strided_slice %0 {offsets = [1, 1, 0, 0], sizes = [1, 1, 8, 32], strides = [1, 1, 1, 1]} : vector<2x4x8x32xf32> to vector<1x1x8x32xf32>
    %195 = vector.shape_cast %194 : vector<1x1x8x32xf32> to vector<8x32xf32>
    %196 = vector.broadcast %56 : vector<1x1xf32> to vector<8x32xf32>
    %197 = arith.mulf %195, %196 : vector<8x32xf32>
    %198 = vector.broadcast %60 : vector<1x1xf32> to vector<8x32xf32>
    %199 = arith.addf %197, %198 : vector<8x32xf32>
    %cst_37 = arith.constant 0.000000e+00 : f32
    %200 = vector.broadcast %cst_37 : f32 to vector<8x32xf32>
    %201 = arith.subf %200, %199 : vector<8x32xf32>
    %202 = math.exp %201 : vector<8x32xf32>
    %cst_38 = arith.constant 1.000000e+00 : f32
    %203 = vector.broadcast %cst_38 : f32 to vector<8x32xf32>
    %204 = arith.addf %203, %202 : vector<8x32xf32>
    %205 = tpu.reciprocal %204 {approx = true} : vector<8x32xf32> -> vector<8x32xf32>
    %206 = arith.mulf %199, %205 : vector<8x32xf32>
    %207 = arith.maximumf %193, %206 : vector<8x32xf32>
    %208 = vector.extract_strided_slice %207 {offsets = [0, 0], sizes = [8, 16], strides = [1, 1]} : vector<8x32xf32> to vector<8x16xf32>
    %209 = vector.extract_strided_slice %207 {offsets = [0, 16], sizes = [8, 16], strides = [1, 1]} : vector<8x32xf32> to vector<8x16xf32>
    %210 = arith.maximumf %208, %209 : vector<8x16xf32>
    %211 = vector.extract_strided_slice %0 {offsets = [1, 2, 0, 0], sizes = [1, 1, 8, 32], strides = [1, 1, 1, 1]} : vector<2x4x8x32xf32> to vector<1x1x8x32xf32>
    %212 = vector.shape_cast %211 : vector<1x1x8x32xf32> to vector<8x32xf32>
    %213 = vector.broadcast %86 : vector<1x1xf32> to vector<8x32xf32>
    %214 = arith.mulf %212, %213 : vector<8x32xf32>
    %215 = vector.broadcast %90 : vector<1x1xf32> to vector<8x32xf32>
    %216 = arith.addf %214, %215 : vector<8x32xf32>
    %cst_39 = arith.constant 0.000000e+00 : f32
    %217 = vector.broadcast %cst_39 : f32 to vector<8x32xf32>
    %218 = arith.subf %217, %216 : vector<8x32xf32>
    %219 = math.exp %218 : vector<8x32xf32>
    %cst_40 = arith.constant 1.000000e+00 : f32
    %220 = vector.broadcast %cst_40 : f32 to vector<8x32xf32>
    %221 = arith.addf %220, %219 : vector<8x32xf32>
    %222 = tpu.reciprocal %221 {approx = true} : vector<8x32xf32> -> vector<8x32xf32>
    %223 = arith.mulf %216, %222 : vector<8x32xf32>
    %224 = vector.extract_strided_slice %0 {offsets = [1, 3, 0, 0], sizes = [1, 1, 8, 32], strides = [1, 1, 1, 1]} : vector<2x4x8x32xf32> to vector<1x1x8x32xf32>
    %225 = vector.shape_cast %224 : vector<1x1x8x32xf32> to vector<8x32xf32>
    %226 = vector.broadcast %116 : vector<1x1xf32> to vector<8x32xf32>
    %227 = arith.mulf %225, %226 : vector<8x32xf32>
    %228 = vector.broadcast %120 : vector<1x1xf32> to vector<8x32xf32>
    %229 = arith.addf %227, %228 : vector<8x32xf32>
    %cst_41 = arith.constant 0.000000e+00 : f32
    %230 = vector.broadcast %cst_41 : f32 to vector<8x32xf32>
    %231 = arith.subf %230, %229 : vector<8x32xf32>
    %232 = math.exp %231 : vector<8x32xf32>
    %cst_42 = arith.constant 1.000000e+00 : f32
    %233 = vector.broadcast %cst_42 : f32 to vector<8x32xf32>
    %234 = arith.addf %233, %232 : vector<8x32xf32>
    %235 = tpu.reciprocal %234 {approx = true} : vector<8x32xf32> -> vector<8x32xf32>
    %236 = arith.mulf %229, %235 : vector<8x32xf32>
    %237 = arith.maximumf %223, %236 : vector<8x32xf32>
    %238 = vector.extract_strided_slice %237 {offsets = [0, 0], sizes = [8, 16], strides = [1, 1]} : vector<8x32xf32> to vector<8x16xf32>
    %239 = vector.extract_strided_slice %237 {offsets = [0, 16], sizes = [8, 16], strides = [1, 1]} : vector<8x32xf32> to vector<8x16xf32>
    %240 = arith.maximumf %238, %239 : vector<8x16xf32>
    %241 = tpu.concatenate %150, %180, %210, %240 in 0 : vector<8x16xf32>, vector<8x16xf32>, vector<8x16xf32>, vector<8x16xf32> -> vector<32x16xf32>
    %c0_43 = arith.constant 0 : index
    %c0_44 = arith.constant 0 : index
    %242 = vector.load %arg5[%c0_43, %c0_44] : memref<6x32xf32, #tpu.memory_space<vmem>>, vector<6x32xf32>
    %c0_45 = arith.constant 0 : index
    %c0_46 = arith.constant 0 : index
    %243 = vector.load %arg3[%c0_45, %c0_46] : memref<16x32xf32, #tpu.memory_space<vmem>>, vector<16x32xf32>
    %cst_47 = arith.constant dense<0.000000e+00> : vector<32x32xf32>
    %244 = tpu.matmul %241, %243, %cst_47 {dimension_numbers = #tpu.dot_dimension_numbers<[1], [0], [0], [1], [0, 0, 1, 1], [], []>} : vector<32x16xf32>, vector<16x32xf32>, vector<32x32xf32> -> vector<32x32xf32>
    %245 = vector.extract_strided_slice %242 {offsets = [0, 0], sizes = [1, 32], strides = [1, 1]} : vector<6x32xf32> to vector<1x32xf32>
    %246 = vector.broadcast %245 : vector<1x32xf32> to vector<32x32xf32>
    %247 = arith.addf %244, %246 : vector<32x32xf32>
    %248 = vector.extract_strided_slice %247 {offsets = [0, 0], sizes = [16, 32], strides = [1, 1]} : vector<32x32xf32> to vector<16x32xf32>
    %cst_48 = arith.constant dense<0xFF800000> : vector<32xf32>
    %249 = vector.multi_reduction <maximumf>, %248, %cst_48 [0] : vector<16x32xf32> to vector<32xf32>
    %250 = vector.shape_cast %249 : vector<32xf32> to vector<1x32xf32>
    %251 = vector.extract_strided_slice %247 {offsets = [16, 0], sizes = [16, 32], strides = [1, 1]} : vector<32x32xf32> to vector<16x32xf32>
    %cst_49 = arith.constant dense<0xFF800000> : vector<32xf32>
    %252 = vector.multi_reduction <maximumf>, %251, %cst_49 [0] : vector<16x32xf32> to vector<32xf32>
    %253 = vector.shape_cast %252 : vector<32xf32> to vector<1x32xf32>
    %254 = tpu.concatenate %250, %253 in 0 : vector<1x32xf32>, vector<1x32xf32> -> vector<2x32xf32>
    %255 = vector.extract_strided_slice %247 {offsets = [0, 0], sizes = [16, 32], strides = [1, 1]} : vector<32x32xf32> to vector<16x32xf32>
    %cst_50 = arith.constant dense<0.000000e+00> : vector<32xf32>
    %256 = vector.multi_reduction <add>, %255, %cst_50 [0] : vector<16x32xf32> to vector<32xf32>
    %257 = vector.shape_cast %256 : vector<32xf32> to vector<1x32xf32>
    %cst_51 = arith.constant 1.600000e+01 : f32
    %258 = vector.broadcast %cst_51 : f32 to vector<1x32xf32>
    %259 = arith.divf %257, %258 : vector<1x32xf32>
    %260 = vector.extract_strided_slice %247 {offsets = [16, 0], sizes = [16, 32], strides = [1, 1]} : vector<32x32xf32> to vector<16x32xf32>
    %cst_52 = arith.constant dense<0.000000e+00> : vector<32xf32>
    %261 = vector.multi_reduction <add>, %260, %cst_52 [0] : vector<16x32xf32> to vector<32xf32>
    %262 = vector.shape_cast %261 : vector<32xf32> to vector<1x32xf32>
    %cst_53 = arith.constant 1.600000e+01 : f32
    %263 = vector.broadcast %cst_53 : f32 to vector<1x32xf32>
    %264 = arith.divf %262, %263 : vector<1x32xf32>
    %265 = tpu.concatenate %259, %264 in 0 : vector<1x32xf32>, vector<1x32xf32> -> vector<2x32xf32>
    %c0_54 = arith.constant 0 : index
    %c0_55 = arith.constant 0 : index
    %c0_56 = arith.constant 0 : index
    %266 = vector.load %arg4[%c0_54, %c0_55, %c0_56] : memref<5x32x32xf32, #tpu.memory_space<vmem>>, vector<1x32x32xf32>
    %267 = vector.shape_cast %266 : vector<1x32x32xf32> to vector<32x32xf32>
    %cst_57 = arith.constant dense<0.000000e+00> : vector<2x32xf32>
    %268 = tpu.matmul %254, %267, %cst_57 {dimension_numbers = #tpu.dot_dimension_numbers<[1], [0], [0], [1], [0, 0, 1, 1], [], []>} : vector<2x32xf32>, vector<32x32xf32>, vector<2x32xf32> -> vector<2x32xf32>
    %269 = vector.extract_strided_slice %242 {offsets = [1, 0], sizes = [1, 32], strides = [1, 1]} : vector<6x32xf32> to vector<1x32xf32>
    %270 = vector.broadcast %269 : vector<1x32xf32> to vector<2x32xf32>
    %271 = arith.addf %268, %270 : vector<2x32xf32>
    %c1_58 = arith.constant 1 : index
    %c0_59 = arith.constant 0 : index
    %c0_60 = arith.constant 0 : index
    %272 = vector.load %arg4[%c1_58, %c0_59, %c0_60] : memref<5x32x32xf32, #tpu.memory_space<vmem>>, vector<1x32x32xf32>
    %273 = vector.shape_cast %272 : vector<1x32x32xf32> to vector<32x32xf32>
    %cst_61 = arith.constant dense<0.000000e+00> : vector<2x32xf32>
    %274 = tpu.matmul %265, %273, %cst_61 {dimension_numbers = #tpu.dot_dimension_numbers<[1], [0], [0], [1], [0, 0, 1, 1], [], []>} : vector<2x32xf32>, vector<32x32xf32>, vector<2x32xf32> -> vector<2x32xf32>
    %275 = vector.extract_strided_slice %242 {offsets = [2, 0], sizes = [1, 32], strides = [1, 1]} : vector<6x32xf32> to vector<1x32xf32>
    %276 = vector.broadcast %275 : vector<1x32xf32> to vector<2x32xf32>
    %277 = arith.addf %274, %276 : vector<2x32xf32>
    %278 = arith.addf %271, %277 : vector<2x32xf32>
    %cst_62 = arith.constant dense<0xFF800000> : vector<2xf32>
    %279 = vector.multi_reduction <maximumf>, %278, %cst_62 [1] : vector<2x32xf32> to vector<2xf32>
    %280 = vector.shape_cast %279 : vector<2xf32> to vector<2x1xf32>
    %281 = vector.broadcast %280 : vector<2x1xf32> to vector<2x32xf32>
    %282 = arith.subf %278, %281 : vector<2x32xf32>
    %283 = math.exp %282 : vector<2x32xf32>
    %cst_63 = arith.constant dense<0.000000e+00> : vector<2xf32>
    %284 = vector.multi_reduction <add>, %283, %cst_63 [1] : vector<2x32xf32> to vector<2xf32>
    %285 = vector.shape_cast %284 : vector<2xf32> to vector<2x1xf32>
    %286 = tpu.reciprocal %285 {approx = true} : vector<2x1xf32> -> vector<2x1xf32>
    %287 = vector.broadcast %286 : vector<2x1xf32> to vector<2x32xf32>
    %288 = arith.mulf %283, %287 : vector<2x32xf32>
    %289 = vector.extract_strided_slice %247 {offsets = [0, 0], sizes = [16, 32], strides = [1, 1]} : vector<32x32xf32> to vector<16x32xf32>
    %290 = vector.extract_strided_slice %288 {offsets = [0, 0], sizes = [1, 32], strides = [1, 1]} : vector<2x32xf32> to vector<1x32xf32>
    %291 = vector.broadcast %290 : vector<1x32xf32> to vector<16x32xf32>
    %292 = arith.mulf %289, %291 : vector<16x32xf32>
    %293 = vector.extract_strided_slice %247 {offsets = [16, 0], sizes = [16, 32], strides = [1, 1]} : vector<32x32xf32> to vector<16x32xf32>
    %294 = vector.extract_strided_slice %288 {offsets = [1, 0], sizes = [1, 32], strides = [1, 1]} : vector<2x32xf32> to vector<1x32xf32>
    %295 = vector.broadcast %294 : vector<1x32xf32> to vector<16x32xf32>
    %296 = arith.mulf %293, %295 : vector<16x32xf32>
    %297 = tpu.concatenate %292, %296 in 0 : vector<16x32xf32>, vector<16x32xf32> -> vector<32x32xf32>
    %c2_64 = arith.constant 2 : index
    %c0_65 = arith.constant 0 : index
    %c0_66 = arith.constant 0 : index
    %298 = vector.load %arg4[%c2_64, %c0_65, %c0_66] : memref<5x32x32xf32, #tpu.memory_space<vmem>>, vector<1x32x32xf32>
    %299 = vector.shape_cast %298 : vector<1x32x32xf32> to vector<32x32xf32>
    %cst_67 = arith.constant dense<0.000000e+00> : vector<32x32xf32>
    %300 = tpu.matmul %297, %299, %cst_67 {dimension_numbers = #tpu.dot_dimension_numbers<[1], [0], [0], [1], [0, 0, 1, 1], [], []>} : vector<32x32xf32>, vector<32x32xf32>, vector<32x32xf32> -> vector<32x32xf32>
    %301 = vector.extract_strided_slice %242 {offsets = [3, 0], sizes = [1, 32], strides = [1, 1]} : vector<6x32xf32> to vector<1x32xf32>
    %302 = vector.broadcast %301 : vector<1x32xf32> to vector<32x32xf32>
    %303 = arith.addf %300, %302 : vector<32x32xf32>
    %c3_68 = arith.constant 3 : index
    %c0_69 = arith.constant 0 : index
    %c0_70 = arith.constant 0 : index
    %304 = vector.load %arg4[%c3_68, %c0_69, %c0_70] : memref<5x32x32xf32, #tpu.memory_space<vmem>>, vector<1x32x32xf32>
    %305 = vector.shape_cast %304 : vector<1x32x32xf32> to vector<32x32xf32>
    %cst_71 = arith.constant dense<0.000000e+00> : vector<32x32xf32>
    %306 = tpu.matmul %297, %305, %cst_71 {dimension_numbers = #tpu.dot_dimension_numbers<[1], [0], [0], [1], [0, 0, 1, 1], [], []>} : vector<32x32xf32>, vector<32x32xf32>, vector<32x32xf32> -> vector<32x32xf32>
    %307 = vector.extract_strided_slice %242 {offsets = [4, 0], sizes = [1, 32], strides = [1, 1]} : vector<6x32xf32> to vector<1x32xf32>
    %308 = vector.broadcast %307 : vector<1x32xf32> to vector<32x32xf32>
    %309 = arith.addf %306, %308 : vector<32x32xf32>
    %c4 = arith.constant 4 : index
    %c0_72 = arith.constant 0 : index
    %c0_73 = arith.constant 0 : index
    %310 = vector.load %arg4[%c4, %c0_72, %c0_73] : memref<5x32x32xf32, #tpu.memory_space<vmem>>, vector<1x32x32xf32>
    %311 = vector.shape_cast %310 : vector<1x32x32xf32> to vector<32x32xf32>
    %cst_74 = arith.constant dense<0.000000e+00> : vector<32x32xf32>
    %312 = tpu.matmul %297, %311, %cst_74 {dimension_numbers = #tpu.dot_dimension_numbers<[1], [0], [0], [1], [0, 0, 1, 1], [], []>} : vector<32x32xf32>, vector<32x32xf32>, vector<32x32xf32> -> vector<32x32xf32>
    %313 = vector.extract_strided_slice %242 {offsets = [5, 0], sizes = [1, 32], strides = [1, 1]} : vector<6x32xf32> to vector<1x32xf32>
    %314 = vector.broadcast %313 : vector<1x32xf32> to vector<32x32xf32>
    %315 = arith.addf %312, %314 : vector<32x32xf32>
    %c0_75 = arith.constant 0 : index
    %c0_76 = arith.constant 0 : index
    %316 = vector.load %arg6[%c0_75, %c0_76] : memref<16x16xf32, #tpu.memory_space<vmem>>, vector<16x16xf32>
    %317 = vector.extract_strided_slice %303 {offsets = [0, 0], sizes = [16, 32], strides = [1, 1]} : vector<32x32xf32> to vector<16x32xf32>
    %318 = vector.extract_strided_slice %309 {offsets = [0, 0], sizes = [16, 32], strides = [1, 1]} : vector<32x32xf32> to vector<16x32xf32>
    %319 = vector.extract_strided_slice %315 {offsets = [0, 0], sizes = [16, 32], strides = [1, 1]} : vector<32x32xf32> to vector<16x32xf32>
    %320 = vector.extract_strided_slice %297 {offsets = [0, 0], sizes = [16, 32], strides = [1, 1]} : vector<32x32xf32> to vector<16x32xf32>
    %cst_77 = arith.constant dense<0.000000e+00> : vector<16x16xf32>
    %321 = tpu.matmul %317, %318, %cst_77 {dimension_numbers = #tpu.dot_dimension_numbers<[1], [1], [0], [0], [0, 0, 1, 0], [], []>} : vector<16x32xf32>, vector<16x32xf32>, vector<16x16xf32> -> vector<16x16xf32>
    %cst_78 = arith.constant dense<0xFF800000> : vector<16xf32>
    %322 = vector.multi_reduction <maximumf>, %321, %cst_78 [1] : vector<16x16xf32> to vector<16xf32>
    %323 = vector.shape_cast %322 : vector<16xf32> to vector<16x1xf32>
    %324 = vector.broadcast %323 : vector<16x1xf32> to vector<16x16xf32>
    %325 = arith.subf %321, %324 : vector<16x16xf32>
    %326 = math.exp %325 : vector<16x16xf32>
    %cst_79 = arith.constant dense<0.000000e+00> : vector<16xf32>
    %327 = vector.multi_reduction <add>, %326, %cst_79 [1] : vector<16x16xf32> to vector<16xf32>
    %328 = vector.shape_cast %327 : vector<16xf32> to vector<16x1xf32>
    %329 = tpu.reciprocal %328 {approx = true} : vector<16x1xf32> -> vector<16x1xf32>
    %330 = vector.broadcast %329 : vector<16x1xf32> to vector<16x16xf32>
    %331 = arith.mulf %326, %330 : vector<16x16xf32>
    %cst_80 = arith.constant dense<0.000000e+00> : vector<16x32xf32>
    %332 = tpu.matmul %331, %319, %cst_80 {dimension_numbers = #tpu.dot_dimension_numbers<[1], [0], [0], [1], [0, 0, 1, 1], [], []>} : vector<16x16xf32>, vector<16x32xf32>, vector<16x32xf32> -> vector<16x32xf32>
    %cst_81 = arith.constant dense<0.000000e+00> : vector<16x32xf32>
    %333 = tpu.matmul %316, %332, %cst_81 {dimension_numbers = #tpu.dot_dimension_numbers<[1], [0], [0], [1], [0, 0, 1, 1], [], []>} : vector<16x16xf32>, vector<16x32xf32>, vector<16x32xf32> -> vector<16x32xf32>
    %334 = vector.extract_strided_slice %320 {offsets = [0, 0], sizes = [8, 32], strides = [1, 1]} : vector<16x32xf32> to vector<8x32xf32>
    %335 = vector.extract_strided_slice %320 {offsets = [8, 0], sizes = [8, 32], strides = [1, 1]} : vector<16x32xf32> to vector<8x32xf32>
    %c0_82 = arith.constant 0 : index
    %c0_83 = arith.constant 0 : index
    %336 = memref.load %arg7[%c0_82, %c0_83] : memref<3x2xf32, #tpu.memory_space<smem>>
    %337 = vector.broadcast %336 : f32 to vector<8x32xf32>
    %338 = arith.mulf %337, %334 : vector<8x32xf32>
    %cst_84 = arith.constant 0.000000e+00 : f32
    %339 = vector.broadcast %cst_84 : f32 to vector<8x32xf32>
    %340 = arith.addf %339, %338 : vector<8x32xf32>
    %c0_85 = arith.constant 0 : index
    %c1_86 = arith.constant 1 : index
    %341 = memref.load %arg7[%c0_85, %c1_86] : memref<3x2xf32, #tpu.memory_space<smem>>
    %342 = vector.broadcast %341 : f32 to vector<8x32xf32>
    %343 = arith.mulf %342, %335 : vector<8x32xf32>
    %344 = arith.addf %340, %343 : vector<8x32xf32>
    %c0_87 = arith.constant 0 : index
    %345 = memref.load %arg8[%c0_87] : memref<3xf32, #tpu.memory_space<smem>>
    %346 = vector.broadcast %345 : f32 to vector<8x32xf32>
    %347 = arith.addf %344, %346 : vector<8x32xf32>
    %c1_88 = arith.constant 1 : index
    %c0_89 = arith.constant 0 : index
    %348 = memref.load %arg7[%c1_88, %c0_89] : memref<3x2xf32, #tpu.memory_space<smem>>
    %349 = vector.broadcast %348 : f32 to vector<8x32xf32>
    %350 = arith.mulf %349, %334 : vector<8x32xf32>
    %cst_90 = arith.constant 0.000000e+00 : f32
    %351 = vector.broadcast %cst_90 : f32 to vector<8x32xf32>
    %352 = arith.addf %351, %350 : vector<8x32xf32>
    %c1_91 = arith.constant 1 : index
    %c1_92 = arith.constant 1 : index
    %353 = memref.load %arg7[%c1_91, %c1_92] : memref<3x2xf32, #tpu.memory_space<smem>>
    %354 = vector.broadcast %353 : f32 to vector<8x32xf32>
    %355 = arith.mulf %354, %335 : vector<8x32xf32>
    %356 = arith.addf %352, %355 : vector<8x32xf32>
    %c1_93 = arith.constant 1 : index
    %357 = memref.load %arg8[%c1_93] : memref<3xf32, #tpu.memory_space<smem>>
    %358 = vector.broadcast %357 : f32 to vector<8x32xf32>
    %359 = arith.addf %356, %358 : vector<8x32xf32>
    %c2_94 = arith.constant 2 : index
    %c0_95 = arith.constant 0 : index
    %360 = memref.load %arg7[%c2_94, %c0_95] : memref<3x2xf32, #tpu.memory_space<smem>>
    %361 = vector.broadcast %360 : f32 to vector<8x32xf32>
    %362 = arith.mulf %361, %334 : vector<8x32xf32>
    %cst_96 = arith.constant 0.000000e+00 : f32
    %363 = vector.broadcast %cst_96 : f32 to vector<8x32xf32>
    %364 = arith.addf %363, %362 : vector<8x32xf32>
    %c2_97 = arith.constant 2 : index
    %c1_98 = arith.constant 1 : index
    %365 = memref.load %arg7[%c2_97, %c1_98] : memref<3x2xf32, #tpu.memory_space<smem>>
    %366 = vector.broadcast %365 : f32 to vector<8x32xf32>
    %367 = arith.mulf %366, %335 : vector<8x32xf32>
    %368 = arith.addf %364, %367 : vector<8x32xf32>
    %c2_99 = arith.constant 2 : index
    %369 = memref.load %arg8[%c2_99] : memref<3xf32, #tpu.memory_space<smem>>
    %370 = vector.broadcast %369 : f32 to vector<8x32xf32>
    %371 = arith.addf %368, %370 : vector<8x32xf32>
    %cst_100 = arith.constant dense<0.000000e+00> : vector<8x8xf32>
    %372 = tpu.matmul %347, %359, %cst_100 {dimension_numbers = #tpu.dot_dimension_numbers<[1], [1], [0], [0], [0, 0, 1, 0], [], []>} : vector<8x32xf32>, vector<8x32xf32>, vector<8x8xf32> -> vector<8x8xf32>
    %cst_101 = arith.constant dense<0xFF800000> : vector<8xf32>
    %373 = vector.multi_reduction <maximumf>, %372, %cst_101 [1] : vector<8x8xf32> to vector<8xf32>
    %374 = vector.shape_cast %373 : vector<8xf32> to vector<8x1xf32>
    %375 = vector.broadcast %374 : vector<8x1xf32> to vector<8x8xf32>
    %376 = arith.subf %372, %375 : vector<8x8xf32>
    %377 = math.exp %376 : vector<8x8xf32>
    %cst_102 = arith.constant dense<0.000000e+00> : vector<8xf32>
    %378 = vector.multi_reduction <add>, %377, %cst_102 [1] : vector<8x8xf32> to vector<8xf32>
    %379 = vector.shape_cast %378 : vector<8xf32> to vector<8x1xf32>
    %380 = tpu.reciprocal %379 {approx = true} : vector<8x1xf32> -> vector<8x1xf32>
    %381 = vector.broadcast %380 : vector<8x1xf32> to vector<8x8xf32>
    %382 = arith.mulf %377, %381 : vector<8x8xf32>
    %cst_103 = arith.constant dense<0.000000e+00> : vector<8x32xf32>
    %383 = tpu.matmul %382, %371, %cst_103 {dimension_numbers = #tpu.dot_dimension_numbers<[1], [0], [0], [1], [0, 0, 1, 1], [], []>} : vector<8x8xf32>, vector<8x32xf32>, vector<8x32xf32> -> vector<8x32xf32>
    %c0_104 = arith.constant 0 : index
    %384 = memref.load %arg9[%c0_104] : memref<2xf32, #tpu.memory_space<smem>>
    %385 = vector.broadcast %384 : f32 to vector<8x32xf32>
    %386 = arith.mulf %385, %383 : vector<8x32xf32>
    %c0_105 = arith.constant 0 : index
    %387 = memref.load %arg10[%c0_105] : memref<2xf32, #tpu.memory_space<smem>>
    %388 = vector.broadcast %387 : f32 to vector<8x32xf32>
    %389 = arith.addf %386, %388 : vector<8x32xf32>
    %c1_106 = arith.constant 1 : index
    %390 = memref.load %arg9[%c1_106] : memref<2xf32, #tpu.memory_space<smem>>
    %391 = vector.broadcast %390 : f32 to vector<8x32xf32>
    %392 = arith.mulf %391, %383 : vector<8x32xf32>
    %c1_107 = arith.constant 1 : index
    %393 = memref.load %arg10[%c1_107] : memref<2xf32, #tpu.memory_space<smem>>
    %394 = vector.broadcast %393 : f32 to vector<8x32xf32>
    %395 = arith.addf %392, %394 : vector<8x32xf32>
    %396 = tpu.concatenate %389, %395 in 0 : vector<8x32xf32>, vector<8x32xf32> -> vector<16x32xf32>
    %397 = arith.addf %333, %396 : vector<16x32xf32>
    %398 = arith.mulf %397, %320 : vector<16x32xf32>
    %c0_108 = arith.constant 0 : index
    %c0_109 = arith.constant 0 : index
    %c0_110 = arith.constant 0 : index
    %399 = vector.load %arg11[%c0_108, %c0_109, %c0_110] : memref<2x16x32xf32, #tpu.memory_space<vmem>>, vector<1x16x32xf32>
    %400 = vector.shape_cast %399 : vector<1x16x32xf32> to vector<16x32xf32>
    %401 = vector.shape_cast %398 : vector<16x32xf32> to vector<1x16x32xf32>
    tpu.vector_store %arg11[%c0_108, %c0_109, %c0_110], %401 {strides = array<i32>} : memref<2x16x32xf32, #tpu.memory_space<vmem>>, vector<1x16x32xf32>,
    %402 = vector.extract_strided_slice %303 {offsets = [16, 0], sizes = [16, 32], strides = [1, 1]} : vector<32x32xf32> to vector<16x32xf32>
    %403 = vector.extract_strided_slice %309 {offsets = [16, 0], sizes = [16, 32], strides = [1, 1]} : vector<32x32xf32> to vector<16x32xf32>
    %404 = vector.extract_strided_slice %315 {offsets = [16, 0], sizes = [16, 32], strides = [1, 1]} : vector<32x32xf32> to vector<16x32xf32>
    %405 = vector.extract_strided_slice %297 {offsets = [16, 0], sizes = [16, 32], strides = [1, 1]} : vector<32x32xf32> to vector<16x32xf32>
    %cst_111 = arith.constant dense<0.000000e+00> : vector<16x16xf32>
    %406 = tpu.matmul %402, %403, %cst_111 {dimension_numbers = #tpu.dot_dimension_numbers<[1], [1], [0], [0], [0, 0, 1, 0], [], []>} : vector<16x32xf32>, vector<16x32xf32>, vector<16x16xf32> -> vector<16x16xf32>
    %cst_112 = arith.constant dense<0xFF800000> : vector<16xf32>
    %407 = vector.multi_reduction <maximumf>, %406, %cst_112 [1] : vector<16x16xf32> to vector<16xf32>
    %408 = vector.shape_cast %407 : vector<16xf32> to vector<16x1xf32>
    %409 = vector.broadcast %408 : vector<16x1xf32> to vector<16x16xf32>
    %410 = arith.subf %406, %409 : vector<16x16xf32>
    %411 = math.exp %410 : vector<16x16xf32>
    %cst_113 = arith.constant dense<0.000000e+00> : vector<16xf32>
    %412 = vector.multi_reduction <add>, %411, %cst_113 [1] : vector<16x16xf32> to vector<16xf32>
    %413 = vector.shape_cast %412 : vector<16xf32> to vector<16x1xf32>
    %414 = tpu.reciprocal %413 {approx = true} : vector<16x1xf32> -> vector<16x1xf32>
    %415 = vector.broadcast %414 : vector<16x1xf32> to vector<16x16xf32>
    %416 = arith.mulf %411, %415 : vector<16x16xf32>
    %cst_114 = arith.constant dense<0.000000e+00> : vector<16x32xf32>
    %417 = tpu.matmul %416, %404, %cst_114 {dimension_numbers = #tpu.dot_dimension_numbers<[1], [0], [0], [1], [0, 0, 1, 1], [], []>} : vector<16x16xf32>, vector<16x32xf32>, vector<16x32xf32> -> vector<16x32xf32>
    %cst_115 = arith.constant dense<0.000000e+00> : vector<16x32xf32>
    %418 = tpu.matmul %316, %417, %cst_115 {dimension_numbers = #tpu.dot_dimension_numbers<[1], [0], [0], [1], [0, 0, 1, 1], [], []>} : vector<16x16xf32>, vector<16x32xf32>, vector<16x32xf32> -> vector<16x32xf32>
    %419 = vector.extract_strided_slice %405 {offsets = [0, 0], sizes = [8, 32], strides = [1, 1]} : vector<16x32xf32> to vector<8x32xf32>
    %420 = vector.extract_strided_slice %405 {offsets = [8, 0], sizes = [8, 32], strides = [1, 1]} : vector<16x32xf32> to vector<8x32xf32>
    %c0_116 = arith.constant 0 : index
    %c0_117 = arith.constant 0 : index
    %421 = memref.load %arg7[%c0_116, %c0_117] : memref<3x2xf32, #tpu.memory_space<smem>>
    %422 = vector.broadcast %421 : f32 to vector<8x32xf32>
    %423 = arith.mulf %422, %419 : vector<8x32xf32>
    %cst_118 = arith.constant 0.000000e+00 : f32
    %424 = vector.broadcast %cst_118 : f32 to vector<8x32xf32>
    %425 = arith.addf %424, %423 : vector<8x32xf32>
    %c0_119 = arith.constant 0 : index
    %c1_120 = arith.constant 1 : index
    %426 = memref.load %arg7[%c0_119, %c1_120] : memref<3x2xf32, #tpu.memory_space<smem>>
    %427 = vector.broadcast %426 : f32 to vector<8x32xf32>
    %428 = arith.mulf %427, %420 : vector<8x32xf32>
    %429 = arith.addf %425, %428 : vector<8x32xf32>
    %c0_121 = arith.constant 0 : index
    %430 = memref.load %arg8[%c0_121] : memref<3xf32, #tpu.memory_space<smem>>
    %431 = vector.broadcast %430 : f32 to vector<8x32xf32>
    %432 = arith.addf %429, %431 : vector<8x32xf32>
    %c1_122 = arith.constant 1 : index
    %c0_123 = arith.constant 0 : index
    %433 = memref.load %arg7[%c1_122, %c0_123] : memref<3x2xf32, #tpu.memory_space<smem>>
    %434 = vector.broadcast %433 : f32 to vector<8x32xf32>
    %435 = arith.mulf %434, %419 : vector<8x32xf32>
    %cst_124 = arith.constant 0.000000e+00 : f32
    %436 = vector.broadcast %cst_124 : f32 to vector<8x32xf32>
    %437 = arith.addf %436, %435 : vector<8x32xf32>
    %c1_125 = arith.constant 1 : index
    %c1_126 = arith.constant 1 : index
    %438 = memref.load %arg7[%c1_125, %c1_126] : memref<3x2xf32, #tpu.memory_space<smem>>
    %439 = vector.broadcast %438 : f32 to vector<8x32xf32>
    %440 = arith.mulf %439, %420 : vector<8x32xf32>
    %441 = arith.addf %437, %440 : vector<8x32xf32>
    %c1_127 = arith.constant 1 : index
    %442 = memref.load %arg8[%c1_127] : memref<3xf32, #tpu.memory_space<smem>>
    %443 = vector.broadcast %442 : f32 to vector<8x32xf32>
    %444 = arith.addf %441, %443 : vector<8x32xf32>
    %c2_128 = arith.constant 2 : index
    %c0_129 = arith.constant 0 : index
    %445 = memref.load %arg7[%c2_128, %c0_129] : memref<3x2xf32, #tpu.memory_space<smem>>
    %446 = vector.broadcast %445 : f32 to vector<8x32xf32>
    %447 = arith.mulf %446, %419 : vector<8x32xf32>
    %cst_130 = arith.constant 0.000000e+00 : f32
    %448 = vector.broadcast %cst_130 : f32 to vector<8x32xf32>
    %449 = arith.addf %448, %447 : vector<8x32xf32>
    %c2_131 = arith.constant 2 : index
    %c1_132 = arith.constant 1 : index
    %450 = memref.load %arg7[%c2_131, %c1_132] : memref<3x2xf32, #tpu.memory_space<smem>>
    %451 = vector.broadcast %450 : f32 to vector<8x32xf32>
    %452 = arith.mulf %451, %420 : vector<8x32xf32>
    %453 = arith.addf %449, %452 : vector<8x32xf32>
    %c2_133 = arith.constant 2 : index
    %454 = memref.load %arg8[%c2_133] : memref<3xf32, #tpu.memory_space<smem>>
    %455 = vector.broadcast %454 : f32 to vector<8x32xf32>
    %456 = arith.addf %453, %455 : vector<8x32xf32>
    %cst_134 = arith.constant dense<0.000000e+00> : vector<8x8xf32>
    %457 = tpu.matmul %432, %444, %cst_134 {dimension_numbers = #tpu.dot_dimension_numbers<[1], [1], [0], [0], [0, 0, 1, 0], [], []>} : vector<8x32xf32>, vector<8x32xf32>, vector<8x8xf32> -> vector<8x8xf32>
    %cst_135 = arith.constant dense<0xFF800000> : vector<8xf32>
    %458 = vector.multi_reduction <maximumf>, %457, %cst_135 [1] : vector<8x8xf32> to vector<8xf32>
    %459 = vector.shape_cast %458 : vector<8xf32> to vector<8x1xf32>
    %460 = vector.broadcast %459 : vector<8x1xf32> to vector<8x8xf32>
    %461 = arith.subf %457, %460 : vector<8x8xf32>
    %462 = math.exp %461 : vector<8x8xf32>
    %cst_136 = arith.constant dense<0.000000e+00> : vector<8xf32>
    %463 = vector.multi_reduction <add>, %462, %cst_136 [1] : vector<8x8xf32> to vector<8xf32>
    %464 = vector.shape_cast %463 : vector<8xf32> to vector<8x1xf32>
    %465 = tpu.reciprocal %464 {approx = true} : vector<8x1xf32> -> vector<8x1xf32>
    %466 = vector.broadcast %465 : vector<8x1xf32> to vector<8x8xf32>
    %467 = arith.mulf %462, %466 : vector<8x8xf32>
    %cst_137 = arith.constant dense<0.000000e+00> : vector<8x32xf32>
    %468 = tpu.matmul %467, %456, %cst_137 {dimension_numbers = #tpu.dot_dimension_numbers<[1], [0], [0], [1], [0, 0, 1, 1], [], []>} : vector<8x8xf32>, vector<8x32xf32>, vector<8x32xf32> -> vector<8x32xf32>
    %c0_138 = arith.constant 0 : index
    %469 = memref.load %arg9[%c0_138] : memref<2xf32, #tpu.memory_space<smem>>
    %470 = vector.broadcast %469 : f32 to vector<8x32xf32>
    %471 = arith.mulf %470, %468 : vector<8x32xf32>
    %c0_139 = arith.constant 0 : index
    %472 = memref.load %arg10[%c0_139] : memref<2xf32, #tpu.memory_space<smem>>
    %473 = vector.broadcast %472 : f32 to vector<8x32xf32>
    %474 = arith.addf %471, %473 : vector<8x32xf32>
    %c1_140 = arith.constant 1 : index
    %475 = memref.load %arg9[%c1_140] : memref<2xf32, #tpu.memory_space<smem>>
    %476 = vector.broadcast %475 : f32 to vector<8x32xf32>
    %477 = arith.mulf %476, %468 : vector<8x32xf32>
    %c1_141 = arith.constant 1 : index
    %478 = memref.load %arg10[%c1_141] : memref<2xf32, #tpu.memory_space<smem>>
    %479 = vector.broadcast %478 : f32 to vector<8x32xf32>
    %480 = arith.addf %477, %479 : vector<8x32xf32>
    %481 = tpu.concatenate %474, %480 in 0 : vector<8x32xf32>, vector<8x32xf32> -> vector<16x32xf32>
    %482 = arith.addf %418, %481 : vector<16x32xf32>
    %483 = arith.mulf %482, %405 : vector<16x32xf32>
    %c1_142 = arith.constant 1 : index
    %c0_143 = arith.constant 0 : index
    %c0_144 = arith.constant 0 : index
    %484 = vector.load %arg11[%c1_142, %c0_143, %c0_144] : memref<2x16x32xf32, #tpu.memory_space<vmem>>, vector<1x16x32xf32>
    %485 = vector.shape_cast %484 : vector<1x16x32xf32> to vector<16x32xf32>
    %486 = vector.shape_cast %483 : vector<16x32xf32> to vector<1x16x32xf32>
    tpu.vector_store %arg11[%c1_142, %c0_143, %c0_144], %486 {strides = array<i32>} : memref<2x16x32xf32, #tpu.memory_space<vmem>>, vector<1x16x32xf32>,
    return
  }
}

</mosaic_0001>

<llo_original>
// kernel: block_cs_ann_forward.1
$region0: #{block_cs_ann_forward.1}
  #allocation0 [shape = 'u32[]', space=smem, size = 0x4, offset = 0x4, fixed_abs, tag = 'smem constant byte address 0x4 - core index']
  #allocation1 [shape = 'u32[72,128]{1,0:T(1,128)}', space=vmem, size = 0x9000, scoped, tag = 'internal scratch']
  %s0 = inlined_call_operand.vmem [shape: f32[2,4,8,32], index: 0, kind: input, shape index: {}]
  %s1 = inlined_call_operand.vmem [shape: f32[4], index: 1, kind: input, shape index: {}]
  %s2 = inlined_call_operand.vmem [shape: f32[4], index: 2, kind: input, shape index: {}]
  %s3 = inlined_call_operand.vmem [shape: f32[16,32], index: 3, kind: input, shape index: {}]
  %s4 = inlined_call_operand.vmem [shape: f32[5,32,32], index: 4, kind: input, shape index: {}]
  %s5 = inlined_call_operand.hbm [shape: f32[6,32], index: 5, kind: input, shape index: {}]
  %s6 = inlined_call_operand.vmem [shape: f32[16,16], index: 6, kind: input, shape index: {}]
  %s7 = inlined_call_operand.vmem [shape: f32[3,2], index: 7, kind: input, shape index: {}]
  %s8 = inlined_call_operand.vmem [shape: f32[3], index: 8, kind: input, shape index: {}]
  %s9 = inlined_call_operand.vmem [shape: f32[2], index: 9, kind: input, shape index: {}]
  %s10 = inlined_call_operand.vmem [shape: f32[2], index: 10, kind: input, shape index: {}]
  %s11 = inlined_call_operand.hbm [shape: f32[2,16,32], index: 11, kind: output, shape index: {}]
  %s12 = sld [smem:[#allocation0]]
  $region82: #{block_cs_ann_forward.1} parent=0
    _
  %s14 = ssub.s32 1, %s12
  %s15 = scalar_select 0, %s14, %s12
  $region1: #{block_cs_ann_forward.1} parent=0
    #allocation2 [shape = 'u8[512]{0}', space=smem, size = 0x200, scoped, tag = 'input window, operand 1, single buffered']
    #allocation3 [shape = 's32[1]{0}', space=sflag, size = 0x4, scoped, tag = 'scoped memory for block_cs_ann_forward.1']
    #allocation4 [shape = 's32[1]{0}', space=sflag, size = 0x4, scoped, tag = 'scoped memory for block_cs_ann_forward.1']
    #allocation5 [shape = 's32[1]{0}', space=sflag, size = 0x4, scoped, tag = 'scoped memory for block_cs_ann_forward.1']
    #allocation6 [shape = 'u8[512]{0}', space=smem, size = 0x200, scoped, tag = 'input window, operand 2, single buffered']
    #allocation7 [shape = 's32[1]{0}', space=sflag, size = 0x4, scoped, tag = 'scoped memory for block_cs_ann_forward.1']
    #allocation8 [shape = 'u8[4096]{0}', space=vmem, size = 0x1000, scoped, tag = 'input window, operand 5, single buffered']
    #allocation9 [shape = 'u8[2048]{0}', space=smem, size = 0x800, scoped, tag = 'input window, operand 7, single buffered']
    #allocation10 [shape = 'u8[512]{0}', space=smem, size = 0x200, scoped, tag = 'input window, operand 8, single buffered']
    #allocation11 [shape = 's32[1]{0}', space=sflag, size = 0x4, scoped, tag = 'scoped memory for block_cs_ann_forward.1']
    #allocation12 [shape = 'u8[512]{0}', space=smem, size = 0x200, scoped, tag = 'input window, operand 9, single buffered']
    #allocation13 [shape = 'u8[512]{0}', space=smem, size = 0x200, scoped, tag = 'input window, operand 10, single buffered']
    #allocation14 [shape = 's32[1]{0}', space=sflag, size = 0x4, scoped, tag = 'scoped memory for block_cs_ann_forward.1']
    #allocation15 [shape = 'u8[16384]{0}', space=vmem, size = 0x4000, scoped, tag = 'output window, operand 0, single buffered']
    %16 = vsyncpa [#allocation5], 0
    %17 = vsyncpa [#allocation7], 0
    %18 = vsyncpa [#allocation3], 0
    %19 = vsyncpa [#allocation11], 0
    %20 = vsyncpa [#allocation14], 0
    %21 = vsyncpa [#allocation4], 0
    // Predicated region
    $region2: #{block_cs_ann_forward.1} parent=1 // pred_check
      _
    $region3: #{block_cs_ann_forward.1} parent=1 // pred_check_branch
      %23 = sbr.rel (0) target = $region5
    $region4: #{block_cs_ann_forward.1} parent=1 // pred_region
      _
    $region5: #{block_cs_ann_forward.1} parent=1 // pred_fallthru
      _
    // Predicated region
    $region6: #{block_cs_ann_forward.1} parent=1 // pred_check
      _
    $region7: #{block_cs_ann_forward.1} parent=1 // pred_check_branch
      %25 = sbr.rel (0) target = $region9
    $region8: #{block_cs_ann_forward.1} parent=1 // pred_region
      %27 = vsyncadd [#allocation5], 0
      %s29 = sshll.u32 %s1, 4
      %s30 = int_to_ptr.vmem [resolvable:$true] %s29
      %32 = dma.vmem_to_smem %s30, 16, [#allocation2], [#allocation5]
    $region9: #{block_cs_ann_forward.1} parent=1 // pred_fallthru
      _
    // Predicated region
    $region10: #{block_cs_ann_forward.1} parent=1 // pred_check
      _
    $region11: #{block_cs_ann_forward.1} parent=1 // pred_check_branch
      %34 = sbr.rel (0) target = $region13
    $region12: #{block_cs_ann_forward.1} parent=1 // pred_region
      %36 = vsyncadd [#allocation7], 0
      %s38 = sshll.u32 %s2, 4
      %s39 = int_to_ptr.vmem [resolvable:$true] %s38
      %41 = dma.vmem_to_smem %s39, 16, [#allocation6], [#allocation7]
    $region13: #{block_cs_ann_forward.1} parent=1 // pred_fallthru
      _
    // Predicated region
    $region14: #{block_cs_ann_forward.1} parent=1 // pred_check
      _
    $region15: #{block_cs_ann_forward.1} parent=1 // pred_check_branch
      %43 = sbr.rel (0) target = $region17
    $region16: #{block_cs_ann_forward.1} parent=1 // pred_region
      _
    $region17: #{block_cs_ann_forward.1} parent=1 // pred_fallthru
      _
    // Predicated region
    $region18: #{block_cs_ann_forward.1} parent=1 // pred_check
      _
    $region19: #{block_cs_ann_forward.1} parent=1 // pred_check_branch
      %45 = sbr.rel (0) target = $region21
    $region20: #{block_cs_ann_forward.1} parent=1 // pred_region
      _
    $region21: #{block_cs_ann_forward.1} parent=1 // pred_fallthru
      _
    // Predicated region
    $region22: #{block_cs_ann_forward.1} parent=1 // pred_check
      _
    $region23: #{block_cs_ann_forward.1} parent=1 // pred_check_branch
      %47 = sbr.rel (0) target = $region25
    $region24: #{block_cs_ann_forward.1} parent=1 // pred_region
      %49 = vsyncadd [#allocation3], 0
      %s51 = sshll.u32 %s5, 4
      %s52 = int_to_ptr.hbm [resolvable:$true] %s51
      %s53 = sshll.u32 [#allocation8], 4
      %s54 = int_to_ptr.vmem [resolvable:$true] %s53
      %56 = dma.hbm_to_vmem [thread:$0]  %s52, 128, %s54, [#allocation3]
    $region25: #{block_cs_ann_forward.1} parent=1 // pred_fallthru
      _
    // Predicated region
    $region26: #{block_cs_ann_forward.1} parent=1 // pred_check
      _
    $region27: #{block_cs_ann_forward.1} parent=1 // pred_check_branch
      %58 = sbr.rel (0) target = $region29
    $region28: #{block_cs_ann_forward.1} parent=1 // pred_region
      _
    $region29: #{block_cs_ann_forward.1} parent=1 // pred_fallthru
      _
    // Predicated region
    $region30: #{block_cs_ann_forward.1} parent=1 // pred_check
      _
    $region31: #{block_cs_ann_forward.1} parent=1 // pred_check_branch
      %60 = sbr.rel (0) target = $region33
    $region32: #{block_cs_ann_forward.1} parent=1 // pred_region
      %62 = vsyncadd [#allocation7], 0
      %s64 = sshll.u32 %s7, 4
      %s65 = int_to_ptr.vmem [resolvable:$true] %s64
      %67 = dma.vmem_to_smem %s65, 64, [#allocation9], [#allocation7]
    $region33: #{block_cs_ann_forward.1} parent=1 // pred_fallthru
      _
    // Predicated region
    $region34: #{block_cs_ann_forward.1} parent=1 // pred_check
      _
    $region35: #{block_cs_ann_forward.1} parent=1 // pred_check_branch
      %69 = sbr.rel (0) target = $region37
    $region36: #{block_cs_ann_forward.1} parent=1 // pred_region
      %71 = vsyncadd [#allocation11], 0
      %s73 = sshll.u32 %s8, 4
      %s74 = int_to_ptr.vmem [resolvable:$true] %s73
      %76 = dma.vmem_to_smem %s74, 16, [#allocation10], [#allocation11]
    $region37: #{block_cs_ann_forward.1} parent=1 // pred_fallthru
      _
    // Predicated region
    $region38: #{block_cs_ann_forward.1} parent=1 // pred_check
      _
    $region39: #{block_cs_ann_forward.1} parent=1 // pred_check_branch
      %78 = sbr.rel (0) target = $region41
    $region40: #{block_cs_ann_forward.1} parent=1 // pred_region
      %80 = vsyncadd [#allocation11], 0
      %s82 = sshll.u32 %s9, 4
      %s83 = int_to_ptr.vmem [resolvable:$true] %s82
      %85 = dma.vmem_to_smem %s83, 16, [#allocation12], [#allocation11]
    $region41: #{block_cs_ann_forward.1} parent=1 // pred_fallthru
      _
    // Predicated region
    $region42: #{block_cs_ann_forward.1} parent=1 // pred_check
      _
    $region43: #{block_cs_ann_forward.1} parent=1 // pred_check_branch
      %87 = sbr.rel (0) target = $region45
    $region44: #{block_cs_ann_forward.1} parent=1 // pred_region
      %89 = vsyncadd [#allocation14], 0
      %s91 = sshll.u32 %s10, 4
      %s92 = int_to_ptr.vmem [resolvable:$true] %s91
      %94 = dma.vmem_to_smem %s92, 16, [#allocation13], [#allocation14]
    $region45: #{block_cs_ann_forward.1} parent=1 // pred_fallthru
      _
    // Predicated region
    $region46: #{block_cs_ann_forward.1} parent=1 // pred_check
      _
    $region47: #{block_cs_ann_forward.1} parent=1 // pred_check_branch
      %96 = sbr.rel (0) target = $region49
    $region48: #{block_cs_ann_forward.1} parent=1 // pred_region
      %98 = dma.done [#allocation5], 16
    $region49: #{block_cs_ann_forward.1} parent=1 // pred_fallthru
      _
    // Predicated region
    $region50: #{block_cs_ann_forward.1} parent=1 // pred_check
      _
    $region51: #{block_cs_ann_forward.1} parent=1 // pred_check_branch
      %100 = sbr.rel (0) target = $region53
    $region52: #{block_cs_ann_forward.1} parent=1 // pred_region
      %102 = dma.done [#allocation7], 16
    $region53: #{block_cs_ann_forward.1} parent=1 // pred_fallthru
      _
    // Predicated region
    $region54: #{block_cs_ann_forward.1} parent=1 // pred_check
      _
    $region55: #{block_cs_ann_forward.1} parent=1 // pred_check_branch
      %104 = sbr.rel (0) target = $region57
    $region56: #{block_cs_ann_forward.1} parent=1 // pred_region
      %106 = dma.done [#allocation3], 128
    $region57: #{block_cs_ann_forward.1} parent=1 // pred_fallthru
      _
    // Predicated region
    $region58: #{block_cs_ann_forward.1} parent=1 // pred_check
      _
    $region59: #{block_cs_ann_forward.1} parent=1 // pred_check_branch
      %108 = sbr.rel (0) target = $region61
    $region60: #{block_cs_ann_forward.1} parent=1 // pred_region
      %110 = dma.done [#allocation7], 64
    $region61: #{block_cs_ann_forward.1} parent=1 // pred_fallthru
      _
    // Predicated region
    $region62: #{block_cs_ann_forward.1} parent=1 // pred_check
      _
    $region63: #{block_cs_ann_forward.1} parent=1 // pred_check_branch
      %112 = sbr.rel (0) target = $region65
    $region64: #{block_cs_ann_forward.1} parent=1 // pred_region
      %114 = dma.done [#allocation11], 16
    $region65: #{block_cs_ann_forward.1} parent=1 // pred_fallthru
      _
    // Predicated region
    $region66: #{block_cs_ann_forward.1} parent=1 // pred_check
      _
    $region67: #{block_cs_ann_forward.1} parent=1 // pred_check_branch
      %116 = sbr.rel (0) target = $region69
    $region68: #{block_cs_ann_forward.1} parent=1 // pred_region
      %118 = dma.done [#allocation11], 16
    $region69: #{block_cs_ann_forward.1} parent=1 // pred_fallthru
      _
    // Predicated region
    $region70: #{block_cs_ann_forward.1} parent=1 // pred_check
      _
    $region71: #{block_cs_ann_forward.1} parent=1 // pred_check_branch
      %120 = sbr.rel (0) target = $region73
    $region72: #{block_cs_ann_forward.1} parent=1 // pred_region
      %122 = dma.done [#allocation14], 16
    $region73: #{block_cs_ann_forward.1} parent=1 // pred_fallthru
      _
    %123 = sfence
    %v124 = vld [vmem:[%s0] sm:$0xff]
    %v125 = vld [vmem:[%s0 + $0x8] sm:$0xff]
    %v126 = vld [vmem:[%s0 + $0x10] sm:$0xff]
    %v127 = vld [vmem:[%s0 + $0x18] sm:$0xff]
    %v128 = vld [vmem:[%s0 + $0x20] sm:$0xff]
    %v129 = vld [vmem:[%s0 + $0x28] sm:$0xff]
    %v130 = vld [vmem:[%s0 + $0x30] sm:$0xff]
    %v131 = vld [vmem:[%s0 + $0x38] sm:$0xff]
    %vm132 = vcmask 261120
    %v133 = vsel %vm132, %v124, 0.0
    %v134 = vsel %vm132, %v128, 0.0
    %v135 = vadd.f32 %v133, %v134
    %136 = vadd.xlane.f32.xlu0 %v135
    %v137 = vpop.xlane.xlu0 %136
    %v138 = vrot.slane %v137, 4
    %v139 = vadd.f32 %v137, %v138
    %v140 = vrot.slane %v139, 2
    %v141 = vadd.f32 %v139, %v140
    %v142 = vrot.slane %v141, 1
    %v143 = vadd.f32 %v141, %v142
    %s144 = vtos %v143
    %v145 = vstv %s144
    %v146 = vrcp.pop 512.0
    %v147 = vmul.f32 512.0, %v146
    %v148 = vsub.f32 1.0, %v147
    %v149 = vmul.f32 %v146, %v148
    %v150 = vadd.f32 %v146, %v149
    %vm151 = vweird.f32 %v146
    %v152 = vsel %vm151, %v146, %v150
    %v153 = vmul.f32 %v145, %v152
    %v154 = vsub.f32 %v124, %v153
    %v155 = vsub.f32 %v128, %v153
    %v156 = vmul.f32 %v154, %v154
    %v157 = vmul.f32 %v155, %v155
    %v158 = vsel %vm132, %v156, 0.0
    %v159 = vsel %vm132, %v157, 0.0
    %v160 = vadd.f32 %v158, %v159
    %161 = vadd.xlane.f32.xlu0 %v160
    %v162 = vpop.xlane.xlu0 %161
    %v163 = vrot.slane %v162, 4
    %v164 = vadd.f32 %v162, %v163
    %v165 = vrot.slane %v164, 2
    %v166 = vadd.f32 %v164, %v165
    %v167 = vrot.slane %v166, 1
    %v168 = vadd.f32 %v166, %v167
    %s169 = vtos %v168
    %v170 = vstv %s169
    %v171 = vmul.f32 %v170, %v152
    %v172 = vadd.f32 %v171, 1e-05
    %v173 = vrsqrt.pop %v172
    %v174 = vmul.f32 %v173, %v172
    %v175 = vmul.f32 %v174, %v173
    %v176 = vmul.f32 0.5, %v175
    %v177 = vsub.f32 1.5, %v176
    %v178 = vmul.f32 %v173, %v177
    %vm179 = vweird.f32 %v172
    %vm180 = vweird.f32 %v173
    %vm181 = vmor %vm179, %vm180
    %v182 = vsel %vm181, %v173, %v178
    %s183 = sld [smem:[#allocation2]]
    %v184 = vstv %s183
    %v185 = vmul.f32 %v182, %v184
    %s186 = sld [smem:[#allocation6]]
    %v187 = vmul.f32 %v153, %v185
    %v188 = vstv %s186
    %v189 = vsub.f32 %v188, %v187
    %v190 = vsel %vm132, %v125, 0.0
    %v191 = vsel %vm132, %v129, 0.0
    %v192 = vadd.f32 %v190, %v191
    %193 = vadd.xlane.f32.xlu0 %v192
    %v194 = vpop.xlane.xlu0 %193
    %v195 = vrot.slane %v194, 4
    %v196 = vadd.f32 %v194, %v195
    %v197 = vrot.slane %v196, 2
    %v198 = vadd.f32 %v196, %v197
    %v199 = vrot.slane %v198, 1
    %v200 = vadd.f32 %v198, %v199
    %s201 = vtos %v200
    %v202 = vstv %s201
    %v203 = vmul.f32 %v202, %v152
    %v204 = vsub.f32 %v125, %v203
    %v205 = vsub.f32 %v129, %v203
    %v206 = vmul.f32 %v204, %v204
    %v207 = vmul.f32 %v205, %v205
    %v208 = vsel %vm132, %v206, 0.0
    %v209 = vsel %vm132, %v207, 0.0
    %v210 = vadd.f32 %v208, %v209
    %211 = vadd.xlane.f32.xlu0 %v210
    %v212 = vpop.xlane.xlu0 %211
    %v213 = vrot.slane %v212, 4
    %v214 = vadd.f32 %v212, %v213
    %v215 = vrot.slane %v214, 2
    %v216 = vadd.f32 %v214, %v215
    %v217 = vrot.slane %v216, 1
    %v218 = vadd.f32 %v216, %v217
    %s219 = vtos %v218
    %v220 = vstv %s219
    %v221 = vmul.f32 %v220, %v152
    %v222 = vadd.f32 %v221, 1e-05
    %v223 = vrsqrt.pop %v222
    %v224 = vmul.f32 %v223, %v222
    %v225 = vmul.f32 %v224, %v223
    %v226 = vmul.f32 0.5, %v225
    %v227 = vsub.f32 1.5, %v226
    %v228 = vmul.f32 %v223, %v227
    %vm229 = vweird.f32 %v222
    %vm230 = vweird.f32 %v223
    %vm231 = vmor %vm229, %vm230
    %v232 = vsel %vm231, %v223, %v228
    %s233 = sld [smem:[#allocation2 + $0x1]]
    %v234 = vstv %s233
    %v235 = vmul.f32 %v232, %v234
    %s236 = sld [smem:[#allocation6 + $0x1]]
    %v237 = vmul.f32 %v203, %v235
    %v238 = vstv %s236
    %v239 = vsub.f32 %v238, %v237
    %v240 = vsel %vm132, %v126, 0.0
    %v241 = vsel %vm132, %v130, 0.0
    %v242 = vadd.f32 %v240, %v241
    %243 = vadd.xlane.f32.xlu0 %v242
    %v244 = vpop.xlane.xlu0 %243
    %v245 = vrot.slane %v244, 4
    %v246 = vadd.f32 %v244, %v245
    %v247 = vrot.slane %v246, 2
    %v248 = vadd.f32 %v246, %v247
    %v249 = vrot.slane %v248, 1
    %v250 = vadd.f32 %v248, %v249
    %s251 = vtos %v250
    %v252 = vstv %s251
    %v253 = vmul.f32 %v252, %v152
    %v254 = vsub.f32 %v126, %v253
    %v255 = vsub.f32 %v130, %v253
    %v256 = vmul.f32 %v254, %v254
    %v257 = vmul.f32 %v255, %v255
    %v258 = vsel %vm132, %v256, 0.0
    %v259 = vsel %vm132, %v257, 0.0
    %v260 = vadd.f32 %v258, %v259
    %261 = vadd.xlane.f32.xlu0 %v260
    %v262 = vpop.xlane.xlu0 %261
    %v263 = vrot.slane %v262, 4
    %v264 = vadd.f32 %v262, %v263
    %v265 = vrot.slane %v264, 2
    %v266 = vadd.f32 %v264, %v265
    %v267 = vrot.slane %v266, 1
    %v268 = vadd.f32 %v266, %v267
    %s269 = vtos %v268
    %v270 = vstv %s269
    %v271 = vmul.f32 %v270, %v152
    %v272 = vadd.f32 %v271, 1e-05
    %v273 = vrsqrt.pop %v272
    %v274 = vmul.f32 %v273, %v272
    %v275 = vmul.f32 %v274, %v273
    %v276 = vmul.f32 0.5, %v275
    %v277 = vsub.f32 1.5, %v276
    %v278 = vmul.f32 %v273, %v277
    %vm279 = vweird.f32 %v272
    %vm280 = vweird.f32 %v273
    %vm281 = vmor %vm279, %vm280
    %v282 = vsel %vm281, %v273, %v278
    %s283 = sld [smem:[#allocation2 + $0x2]]
    %v284 = vstv %s283
    %v285 = vmul.f32 %v282, %v284
    %s286 = sld [smem:[#allocation6 + $0x2]]
    %v287 = vmul.f32 %v253, %v285
    %v288 = vstv %s286
    %v289 = vsub.f32 %v288, %v287
    %v290 = vsel %vm132, %v127, 0.0
    %v291 = vsel %vm132, %v131, 0.0
    %v292 = vadd.f32 %v290, %v291
    %293 = vadd.xlane.f32.xlu0 %v292
    %v294 = vpop.xlane.xlu0 %293
    %v295 = vrot.slane %v294, 4
    %v296 = vadd.f32 %v294, %v295
    %v297 = vrot.slane %v296, 2
    %v298 = vadd.f32 %v296, %v297
    %v299 = vrot.slane %v298, 1
    %v300 = vadd.f32 %v298, %v299
    %s301 = vtos %v300
    %v302 = vstv %s301
    %v303 = vmul.f32 %v302, %v152
    %v304 = vsub.f32 %v127, %v303
    %v305 = vsub.f32 %v131, %v303
    %v306 = vmul.f32 %v304, %v304
    %v307 = vmul.f32 %v305, %v305
    %v308 = vsel %vm132, %v306, 0.0
    %v309 = vsel %vm132, %v307, 0.0
    %v310 = vadd.f32 %v308, %v309
    %311 = vadd.xlane.f32.xlu0 %v310
    %v312 = vpop.xlane.xlu0 %311
    %v313 = vrot.slane %v312, 4
    %v314 = vadd.f32 %v312, %v313
    %v315 = vrot.slane %v314, 2
    %v316 = vadd.f32 %v314, %v315
    %v317 = vrot.slane %v316, 1
    %v318 = vadd.f32 %v316, %v317
    %s319 = vtos %v318
    %v320 = vstv %s319
    %v321 = vmul.f32 %v320, %v152
    %v322 = vadd.f32 %v321, 1e-05
    %v323 = vrsqrt.pop %v322
    %v324 = vmul.f32 %v323, %v322
    %v325 = vmul.f32 %v324, %v323
    %v326 = vmul.f32 0.5, %v325
    %v327 = vsub.f32 1.5, %v326
    %v328 = vmul.f32 %v323, %v327
    %vm329 = vweird.f32 %v322
    %vm330 = vweird.f32 %v323
    %vm331 = vmor %vm329, %vm330
    %v332 = vsel %vm331, %v323, %v328
    %s333 = sld [smem:[#allocation2 + $0x3]]
    %v334 = vstv %s333
    %v335 = vmul.f32 %v332, %v334
    %s336 = sld [smem:[#allocation6 + $0x3]]
    %v337 = vmul.f32 %v303, %v335
    %v338 = vstv %s336
    %v339 = vsub.f32 %v338, %v337
    %v340 = vmul.f32 %v124, %v185
    %v341 = vadd.f32 %v340, %v189
    %v342 = vsub.f32 0.0, %v341
    %v343 = vmul.f32 %v342, 1.442695
    %v344 = vpow.pop %v343
    %v345 = vadd.f32 %v344, 1.0
    %v346 = vrcp.pop %v345
    %v347 = vmul.f32 %v341, %v346
    %v348 = vmul.f32 %v125, %v235
    %v349 = vadd.f32 %v348, %v239
    %v350 = vsub.f32 0.0, %v349
    %v351 = vmul.f32 %v350, 1.442695
    %v352 = vpow.pop %v351
    %v353 = vadd.f32 %v352, 1.0
    %v354 = vrcp.pop %v353
    %v355 = vmul.f32 %v349, %v354
    %v356 = vmax.f32 %v347, %v355
    %358 = vrot.lane.b32.xlu0 %v356, 112
    %v359 = vpop.permute.xlu0 %358
    %v361 = vmax.f32 %v356, %v359
    %v362 = vmul.f32 %v126, %v285
    %v363 = vadd.f32 %v362, %v289
    %v364 = vsub.f32 0.0, %v363
    %v365 = vmul.f32 %v364, 1.442695
    %v366 = vpow.pop %v365
    %v367 = vadd.f32 %v366, 1.0
    %v368 = vrcp.pop %v367
    %v369 = vmul.f32 %v363, %v368
    %v370 = vmul.f32 %v127, %v335
    %v371 = vadd.f32 %v370, %v339
    %v372 = vsub.f32 0.0, %v371
    %v373 = vmul.f32 %v372, 1.442695
    %v374 = vpow.pop %v373
    %v375 = vadd.f32 %v374, 1.0
    %v376 = vrcp.pop %v375
    %v377 = vmul.f32 %v371, %v376
    %v378 = vmax.f32 %v369, %v377
    %380 = vrot.lane.b32.xlu0 %v378, 112
    %v381 = vpop.permute.xlu0 %380
    %v383 = vmax.f32 %v378, %v381
    %v384 = vmul.f32 %v128, %v185
    %v385 = vadd.f32 %v384, %v189
    %v386 = vsub.f32 0.0, %v385
    %v387 = vmul.f32 %v386, 1.442695
    %v388 = vpow.pop %v387
    %v389 = vadd.f32 %v388, 1.0
    %v390 = vrcp.pop %v389
    %v391 = vmul.f32 %v385, %v390
    %v392 = vmul.f32 %v129, %v235
    %v393 = vadd.f32 %v392, %v239
    %v394 = vsub.f32 0.0, %v393
    %v395 = vmul.f32 %v394, 1.442695
    %v396 = vpow.pop %v395
    %v397 = vadd.f32 %v396, 1.0
    %v398 = vrcp.pop %v397
    %v399 = vmul.f32 %v393, %v398
    %v400 = vmax.f32 %v391, %v399
    %402 = vrot.lane.b32.xlu0 %v400, 112
    %v403 = vpop.permute.xlu0 %402
    %v405 = vmax.f32 %v400, %v403
    %v406 = vmul.f32 %v130, %v285
    %v407 = vadd.f32 %v406, %v289
    %v408 = vsub.f32 0.0, %v407
    %v409 = vmul.f32 %v408, 1.442695
    %v410 = vpow.pop %v409
    %v411 = vadd.f32 %v410, 1.0
    %v412 = vrcp.pop %v411
    %v413 = vmul.f32 %v407, %v412
    %v414 = vmul.f32 %v131, %v335
    %v415 = vadd.f32 %v414, %v339
    %v416 = vsub.f32 0.0, %v415
    %v417 = vmul.f32 %v416, 1.442695
    %v418 = vpow.pop %v417
    %v419 = vadd.f32 %v418, 1.0
    %v420 = vrcp.pop %v419
    %v421 = vmul.f32 %v415, %v420
    %v422 = vmax.f32 %v413, %v421
    %424 = vrot.lane.b32.xlu0 %v422, 112
    %v425 = vpop.permute.xlu0 %424
    %v427 = vmax.f32 %v422, %v425
    %v428 = vld [vmem:[#allocation8] sm:$0x3f]
    %v429 = vld [vmem:[%s3] sm:$0xff]
    %v430 = vld [vmem:[%s3 + $0x8] sm:$0xff]
    %v431 = vperm.slane %v428, 0
    %vm432 = vcmask 130048
    %v434 = vsel %vm432, %v361, 0
    %v437 = vsel %vm432, %v383, 0
    %v440 = vsel %vm432, %v405, 0
    %v443 = vsel %vm432, %v427, 0
    %445 = vmatpush.msra.mxu0 0.0
    %446 = vmatpush.msra.mxu0 0.0
    %447 = vmatpush.msra.mxu0 0.0
    %448 = vmatpush.msra.mxu0 0.0
    %449 = vmatpush.msra.mxu0 0.0
    %450 = vmatpush.msra.mxu0 0.0
    %451 = vmatpush.msra.mxu0 0.0
    %452 = vmatpush.msra.mxu0 0.0
    %453 = vmatpush.msra.mxu0 0.0
    %454 = vmatpush.msra.mxu0 0.0
    %455 = vmatpush.msra.mxu0 0.0
    %456 = vmatpush.msra.mxu0 0.0
    %457 = vmatpush.msra.mxu0 0.0
    %458 = vmatpush.msra.mxu0 0.0
    %459 = vmatpush.msra.mxu0 %v430
    %460 = vmatpush.msra.mxu0 %v429
    %461 = vmatmul.f32.gmra.mxu0 %v434
    %v462 = vpop.f32.mrf.mxu0
    %v463 = vadd.f32 %v431, %v462
    %464 = vmatmul.f32.gmra.mxu0 %v437
    %v465 = vpop.f32.mrf.mxu0
    %v466 = vadd.f32 %v431, %v465
    %467 = vmatmul.f32.gmra.mxu0 %v440
    %v468 = vpop.f32.mrf.mxu0
    %v469 = vadd.f32 %v431, %v468
    %470 = vmatmul.f32.gmra.mxu0 %v443
    %v471 = vpop.f32.mrf.mxu0
    %v472 = vadd.f32 %v431, %v471
    %473 = vdwg.mxu0
    %v474 = vsel %vm132, %v463, -inf
    %v475 = vsel %vm132, %v466, -inf
    %v476 = vmax.f32 %v474, %v475
    %v477 = vrot.slane %v476, 4
    %v478 = vmax.f32 %v476, %v477
    %v479 = vrot.slane %v478, 2
    %v480 = vmax.f32 %v478, %v479
    %v481 = vrot.slane %v480, 1
    %v482 = vmax.f32 %v480, %v481
    %v483 = vsel %vm132, %v469, -inf
    %v484 = vsel %vm132, %v472, -inf
    %v485 = vmax.f32 %v483, %v484
    %v486 = vrot.slane %v485, 4
    %v487 = vmax.f32 %v485, %v486
    %v488 = vrot.slane %v487, 2
    %v489 = vmax.f32 %v487, %v488
    %v490 = vrot.slane %v489, 1
    %v491 = vmax.f32 %v489, %v490
    %vm492 = vcmask 1040384
    %v493 = vsel %vm492, %v482, %v491
    %v494 = vsel %vm132, %v463, 0.0
    %v495 = vsel %vm132, %v466, 0.0
    %v496 = vadd.f32 %v494, %v495
    %v497 = vrot.slane %v496, 4
    %v498 = vadd.f32 %v496, %v497
    %v499 = vrot.slane %v498, 2
    %v500 = vadd.f32 %v498, %v499
    %v501 = vrot.slane %v500, 1
    %v502 = vadd.f32 %v500, %v501
    %v503 = vrcp.pop 16.0
    %v504 = vmul.f32 16.0, %v503
    %v505 = vsub.f32 1.0, %v504
    %v506 = vmul.f32 %v503, %v505
    %v507 = vadd.f32 %v503, %v506
    %vm508 = vweird.f32 %v503
    %v509 = vsel %vm508, %v503, %v507
    %v510 = vmul.f32 %v502, %v509
    %v511 = vsel %vm132, %v469, 0.0
    %v512 = vsel %vm132, %v472, 0.0
    %v513 = vadd.f32 %v511, %v512
    %v514 = vrot.slane %v513, 4
    %v515 = vadd.f32 %v513, %v514
    %v516 = vrot.slane %v515, 2
    %v517 = vadd.f32 %v515, %v516
    %v518 = vrot.slane %v517, 1
    %v519 = vadd.f32 %v517, %v518
    %v520 = vmul.f32 %v519, %v509
    %v521 = vsel %vm492, %v510, %v520
    %v522 = vld [vmem:[%s4] sm:$0xff]
    %v523 = vld [vmem:[%s4 + $0x8] sm:$0xff]
    %v524 = vld [vmem:[%s4 + $0x10] sm:$0xff]
    %v525 = vld [vmem:[%s4 + $0x18] sm:$0xff]
    %v526 = vperm.slane %v428, 1
    %v528 = vsel %vm132, %v493, 0
    %530 = vmatpush.msra.mxu0 0.0
    %531 = vmatpush.msra.mxu0 0.0
    %532 = vmatpush.msra.mxu0 0.0
    %533 = vmatpush.msra.mxu0 0.0
    %534 = vmatpush.msra.mxu0 0.0
    %535 = vmatpush.msra.mxu0 0.0
    %536 = vmatpush.msra.mxu0 0.0
    %537 = vmatpush.msra.mxu0 0.0
    %538 = vmatpush.msra.mxu0 0.0
    %539 = vmatpush.msra.mxu0 0.0
    %540 = vmatpush.msra.mxu0 0.0
    %541 = vmatpush.msra.mxu0 0.0
    %542 = vmatpush.msra.mxu0 %v525
    %543 = vmatpush.msra.mxu0 %v524
    %544 = vmatpush.msra.mxu0 %v523
    %545 = vmatpush.msra.mxu0 %v522
    %546 = vmatmul.f32.gmra.mxu0 %v528
    %v547 = vpop.f32.mrf.mxu0
    %v548 = vadd.f32 %v526, %v547
    %549 = vdwg.mxu0
    %s550 = scalar_lea.vmem %s4, 32
    %v551 = vld [vmem:[%s550] sm:$0xff]
    %v552 = vld [vmem:[%s550 + $0x8] sm:$0xff]
    %v553 = vld [vmem:[%s550 + $0x10] sm:$0xff]
    %v554 = vld [vmem:[%s550 + $0x18] sm:$0xff]
    %v555 = vperm.slane %v428, 2
    %v557 = vsel %vm132, %v521, 0
    %559 = vmatpush.msra.mxu0 0.0
    %560 = vmatpush.msra.mxu0 0.0
    %561 = vmatpush.msra.mxu0 0.0
    %562 = vmatpush.msra.mxu0 0.0
    %563 = vmatpush.msra.mxu0 0.0
    %564 = vmatpush.msra.mxu0 0.0
    %565 = vmatpush.msra.mxu0 0.0
    %566 = vmatpush.msra.mxu0 0.0
    %567 = vmatpush.msra.mxu0 0.0
    %568 = vmatpush.msra.mxu0 0.0
    %569 = vmatpush.msra.mxu0 0.0
    %570 = vmatpush.msra.mxu0 0.0
    %571 = vmatpush.msra.mxu0 %v554
    %572 = vmatpush.msra.mxu0 %v553
    %573 = vmatpush.msra.mxu0 %v552
    %574 = vmatpush.msra.mxu0 %v551
    %575 = vmatmul.f32.gmra.mxu0 %v557
    %v576 = vpop.f32.mrf.mxu0
    %v577 = vadd.f32 %v555, %v576
    %578 = vdwg.mxu0
    %v579 = vadd.f32 %v548, %v577
    %vm580 = vcmask 254976
    %v581 = vsel %vm580, %v579, -inf
    %582 = vmax.xlane.f32.xlu0 %v581
    %v583 = vpop.xlane.xlu0 %582
    %v584 = vsub.f32 %v579, %v583
    %v585 = vmul.f32 %v584, 1.442695
    %v586 = vpow.pop %v585
    %v587 = vsel %vm580, %v586, 0.0
    %588 = vadd.xlane.f32.xlu0 %v587
    %v589 = vpop.xlane.xlu0 %588
    %v590 = vrcp.pop %v589
    %v591 = vmul.f32 %v586, %v590
    %v592 = vperm.slane %v591, 0
    %v593 = vmul.f32 %v463, %v592
    %v594 = vmul.f32 %v466, %v592
    %v595 = vperm.slane %v591, 1
    %v596 = vmul.f32 %v469, %v595
    %v597 = vmul.f32 %v472, %v595
    %s598 = scalar_lea.vmem %s4, 64
    %v599 = vld [vmem:[%s598] sm:$0xff]
    %v600 = vld [vmem:[%s598 + $0x8] sm:$0xff]
    %v601 = vld [vmem:[%s598 + $0x10] sm:$0xff]
    %v602 = vld [vmem:[%s598 + $0x18] sm:$0xff]
    %v603 = vperm.slane %v428, 3
    %v605 = vsel %vm132, %v593, 0
    %v608 = vsel %vm132, %v594, 0
    %v611 = vsel %vm132, %v596, 0
    %v614 = vsel %vm132, %v597, 0
    %616 = vmatpush.msra.mxu0 0.0
    %617 = vmatpush.msra.mxu0 0.0
    %618 = vmatpush.msra.mxu0 0.0
    %619 = vmatpush.msra.mxu0 0.0
    %620 = vmatpush.msra.mxu0 0.0
    %621 = vmatpush.msra.mxu0 0.0
    %622 = vmatpush.msra.mxu0 0.0
    %623 = vmatpush.msra.mxu0 0.0
    %624 = vmatpush.msra.mxu0 0.0
    %625 = vmatpush.msra.mxu0 0.0
    %626 = vmatpush.msra.mxu0 0.0
    %627 = vmatpush.msra.mxu0 0.0
    %628 = vmatpush.msra.mxu0 %v602
    %629 = vmatpush.msra.mxu0 %v601
    %630 = vmatpush.msra.mxu0 %v600
    %631 = vmatpush.msra.mxu0 %v599
    %632 = vmatmul.f32.gmra.mxu0 %v605
    %v633 = vpop.f32.mrf.mxu0
    %v634 = vadd.f32 %v603, %v633
    %635 = vmatmul.f32.gmra.mxu0 %v608
    %v636 = vpop.f32.mrf.mxu0
    %v637 = vadd.f32 %v603, %v636
    %638 = vmatmul.f32.gmra.mxu0 %v611
    %v639 = vpop.f32.mrf.mxu0
    %v640 = vadd.f32 %v603, %v639
    %641 = vmatmul.f32.gmra.mxu0 %v614
    %v642 = vpop.f32.mrf.mxu0
    %v643 = vadd.f32 %v603, %v642
    %644 = vdwg.mxu0
    %s645 = scalar_lea.vmem %s4, 96
    %v646 = vld [vmem:[%s645] sm:$0xff]
    %v647 = vld [vmem:[%s645 + $0x8] sm:$0xff]
    %v648 = vld [vmem:[%s645 + $0x10] sm:$0xff]
    %v649 = vld [vmem:[%s645 + $0x18] sm:$0xff]
    %v650 = vperm.slane %v428, 4
    %651 = vmatpush.msra.mxu0 0.0
    %652 = vmatpush.msra.mxu0 0.0
    %653 = vmatpush.msra.mxu0 0.0
    %654 = vmatpush.msra.mxu0 0.0
    %655 = vmatpush.msra.mxu0 0.0
    %656 = vmatpush.msra.mxu0 0.0
    %657 = vmatpush.msra.mxu0 0.0
    %658 = vmatpush.msra.mxu0 0.0
    %659 = vmatpush.msra.mxu0 0.0
    %660 = vmatpush.msra.mxu0 0.0
    %661 = vmatpush.msra.mxu0 0.0
    %662 = vmatpush.msra.mxu0 0.0
    %663 = vmatpush.msra.mxu0 %v649
    %664 = vmatpush.msra.mxu0 %v648
    %665 = vmatpush.msra.mxu0 %v647
    %666 = vmatpush.msra.mxu0 %v646
    %667 = vmatmul.f32.gmra.mxu0 %v605
    %v668 = vpop.f32.mrf.mxu0
    %v669 = vadd.f32 %v650, %v668
    %670 = vmatmul.f32.gmra.mxu0 %v608
    %v671 = vpop.f32.mrf.mxu0
    %v672 = vadd.f32 %v650, %v671
    %673 = vmatmul.f32.gmra.mxu0 %v611
    %v674 = vpop.f32.mrf.mxu0
    %v675 = vadd.f32 %v650, %v674
    %676 = vmatmul.f32.gmra.mxu0 %v614
    %v677 = vpop.f32.mrf.mxu0
    %v678 = vadd.f32 %v650, %v677
    %679 = vdwg.mxu0
    %s680 = scalar_lea.vmem %s4, 128
    %v681 = vld [vmem:[%s680] sm:$0xff]
    %v682 = vld [vmem:[%s680 + $0x8] sm:$0xff]
    %v683 = vld [vmem:[%s680 + $0x10] sm:$0xff]
    %v684 = vld [vmem:[%s680 + $0x18] sm:$0xff]
    %v685 = vperm.slane %v428, 5
    %686 = vmatpush.msra.mxu0 0.0
    %687 = vmatpush.msra.mxu0 0.0
    %688 = vmatpush.msra.mxu0 0.0
    %689 = vmatpush.msra.mxu0 0.0
    %690 = vmatpush.msra.mxu0 0.0
    %691 = vmatpush.msra.mxu0 0.0
    %692 = vmatpush.msra.mxu0 0.0
    %693 = vmatpush.msra.mxu0 0.0
    %694 = vmatpush.msra.mxu0 0.0
    %695 = vmatpush.msra.mxu0 0.0
    %696 = vmatpush.msra.mxu0 0.0
    %697 = vmatpush.msra.mxu0 0.0
    %698 = vmatpush.msra.mxu0 %v684
    %699 = vmatpush.msra.mxu0 %v683
    %700 = vmatpush.msra.mxu0 %v682
    %701 = vmatpush.msra.mxu0 %v681
    %702 = vmatmul.f32.gmra.mxu0 %v605
    %v703 = vpop.f32.mrf.mxu0
    %v704 = vadd.f32 %v685, %v703
    %705 = vmatmul.f32.gmra.mxu0 %v608
    %v706 = vpop.f32.mrf.mxu0
    %v707 = vadd.f32 %v685, %v706
    %708 = vmatmul.f32.gmra.mxu0 %v611
    %v709 = vpop.f32.mrf.mxu0
    %v710 = vadd.f32 %v685, %v709
    %711 = vmatmul.f32.gmra.mxu0 %v614
    %v712 = vpop.f32.mrf.mxu0
    %v713 = vadd.f32 %v685, %v712
    %714 = vdwg.mxu0
    %v715 = vld [vmem:[%s6] sm:$0xff]
    %v716 = vld [vmem:[%s6 + $0x8] sm:$0xff]
    %v718 = vsel %vm132, %v634, 0
    %v721 = vsel %vm132, %v637, 0
    %v724 = vsel %vm132, %v669, 0
    %v727 = vsel %vm132, %v672, 0
    %729 = vmatpush.xpose.msra.mxu0 0.0
    %730 = vmatpush.xpose.msra.mxu0 0.0
    %731 = vmatpush.xpose.msra.mxu0 0.0
    %732 = vmatpush.xpose.msra.mxu0 0.0
    %733 = vmatpush.xpose.msra.mxu0 0.0
    %734 = vmatpush.xpose.msra.mxu0 0.0
    %735 = vmatpush.xpose.msra.mxu0 0.0
    %736 = vmatpush.xpose.msra.mxu0 0.0
    %737 = vmatpush.xpose.msra.mxu0 0.0
    %738 = vmatpush.xpose.msra.mxu0 0.0
    %739 = vmatpush.xpose.msra.mxu0 0.0
    %740 = vmatpush.xpose.msra.mxu0 0.0
    %741 = vmatpush.xpose.msra.mxu0 0.0
    %742 = vmatpush.xpose.msra.mxu0 0.0
    %743 = vmatpush.xpose.msra.mxu0 %v727
    %744 = vmatpush.xpose.msra.mxu0 %v724
    %745 = vmatmul.f32.gmra.mxu0 %v718
    %v746 = vpop.f32.mrf.mxu0
    %v747 = vadd.f32 0.0, %v746
    %748 = vmatmul.f32.gmra.mxu0 %v721
    %v749 = vpop.f32.mrf.mxu0
    %v750 = vadd.f32 0.0, %v749
    %751 = vdwg.mxu0
    %v752 = vsel %vm432, %v747, -inf
    %753 = vmax.xlane.f32.xlu0 %v752
    %v754 = vpop.xlane.xlu0 %753
    %v755 = vsel %vm432, %v750, -inf
    %756 = vmax.xlane.f32.xlu0 %v755
    %v757 = vpop.xlane.xlu0 %756
    %v758 = vsub.f32 %v747, %v754
    %v759 = vsub.f32 %v750, %v757
    %v760 = vmul.f32 %v758, 1.442695
    %v761 = vpow.pop %v760
    %v762 = vmul.f32 %v759, 1.442695
    %v763 = vpow.pop %v762
    %v764 = vsel %vm432, %v761, 0.0
    %765 = vadd.xlane.f32.xlu0 %v764
    %v766 = vpop.xlane.xlu0 %765
    %v767 = vsel %vm432, %v763, 0.0
    %768 = vadd.xlane.f32.xlu0 %v767
    %v769 = vpop.xlane.xlu0 %768
    %v770 = vrcp.pop %v766
    %v771 = vrcp.pop %v769
    %v772 = vmul.f32 %v761, %v770
    %v773 = vmul.f32 %v763, %v771
    %v775 = vsel %vm432, %v772, 0
    %v778 = vsel %vm432, %v773, 0
    %780 = vmatpush.msra.mxu0 0.0
    %781 = vmatpush.msra.mxu0 0.0
    %782 = vmatpush.msra.mxu0 0.0
    %783 = vmatpush.msra.mxu0 0.0
    %784 = vmatpush.msra.mxu0 0.0
    %785 = vmatpush.msra.mxu0 0.0
    %786 = vmatpush.msra.mxu0 0.0
    %787 = vmatpush.msra.mxu0 0.0
    %788 = vmatpush.msra.mxu0 0.0
    %789 = vmatpush.msra.mxu0 0.0
    %790 = vmatpush.msra.mxu0 0.0
    %791 = vmatpush.msra.mxu0 0.0
    %792 = vmatpush.msra.mxu0 0.0
    %793 = vmatpush.msra.mxu0 0.0
    %794 = vmatpush.msra.mxu0 %v707
    %795 = vmatpush.msra.mxu0 %v704
    %796 = vmatmul.f32.gmra.mxu0 %v775
    %v797 = vpop.f32.mrf.mxu0
    %v798 = vadd.f32 0.0, %v797
    %799 = vmatmul.f32.gmra.mxu0 %v778
    %v800 = vpop.f32.mrf.mxu0
    %v801 = vadd.f32 0.0, %v800
    %802 = vdwg.mxu0
    %s803 = sld [smem:[#allocation9]]
    %v804 = vstv %s803
    %v805 = vmul.f32 %v804, %v593
    %v806 = vadd.f32 %v805, 0.0
    %s807 = sld [smem:[#allocation9 + $0x1]]
    %v808 = vstv %s807
    %v809 = vmul.f32 %v808, %v594
    %v810 = vadd.f32 %v806, %v809
    %s811 = sld [smem:[#allocation10]]
    %v812 = vstv %s811
    %v813 = vadd.f32 %v810, %v812
    %s814 = sld [smem:[#allocation9 + $0x80]]
    %v815 = vstv %s814
    %v816 = vmul.f32 %v815, %v593
    %v817 = vadd.f32 %v816, 0.0
    %s818 = sld [smem:[#allocation9 + $0x81]]
    %v819 = vstv %s818
    %v820 = vmul.f32 %v819, %v594
    %v821 = vadd.f32 %v817, %v820
    %s822 = sld [smem:[#allocation10 + $0x1]]
    %v823 = vstv %s822
    %v824 = vadd.f32 %v821, %v823
    %s825 = sld [smem:[#allocation9 + $0x100]]
    %v826 = vstv %s825
    %v827 = vmul.f32 %v826, %v593
    %v828 = vadd.f32 %v827, 0.0
    %s829 = sld [smem:[#allocation9 + $0x101]]
    %v830 = vstv %s829
    %v831 = vmul.f32 %v830, %v594
    %v832 = vadd.f32 %v828, %v831
    %s833 = sld [smem:[#allocation10 + $0x2]]
    %v834 = vstv %s833
    %v835 = vadd.f32 %v832, %v834
    %v837 = vsel %vm132, %v813, 0
    %v840 = vsel %vm132, %v824, 0
    %842 = vmatpush.xpose.msra.mxu0 0.0
    %843 = vmatpush.xpose.msra.mxu0 0.0
    %844 = vmatpush.xpose.msra.mxu0 0.0
    %845 = vmatpush.xpose.msra.mxu0 0.0
    %846 = vmatpush.xpose.msra.mxu0 0.0
    %847 = vmatpush.xpose.msra.mxu0 0.0
    %848 = vmatpush.xpose.msra.mxu0 0.0
    %849 = vmatpush.xpose.msra.mxu0 0.0
    %850 = vmatpush.xpose.msra.mxu0 0.0
    %851 = vmatpush.xpose.msra.mxu0 0.0
    %852 = vmatpush.xpose.msra.mxu0 0.0
    %853 = vmatpush.xpose.msra.mxu0 0.0
    %854 = vmatpush.xpose.msra.mxu0 0.0
    %855 = vmatpush.xpose.msra.mxu0 0.0
    %856 = vmatpush.xpose.msra.mxu0 0.0
    %857 = vmatpush.xpose.msra.mxu0 %v840
    %858 = vmatmul.f32.gmra.mxu0 %v837
    %v859 = vpop.f32.mrf.mxu0
    %v860 = vadd.f32 0.0, %v859
    %861 = vdwg.mxu0
    %vm862 = vcmask 64512
    %v863 = vsel %vm862, %v860, -inf
    %864 = vmax.xlane.f32.xlu0 %v863
    %v865 = vpop.xlane.xlu0 %864
    %v866 = vsub.f32 %v860, %v865
    %v867 = vmul.f32 %v866, 1.442695
    %v868 = vpow.pop %v867
    %v869 = vsel %vm862, %v868, 0.0
    %870 = vadd.xlane.f32.xlu0 %v869
    %v871 = vpop.xlane.xlu0 %870
    %v872 = vrcp.pop %v871
    %v873 = vmul.f32 %v868, %v872
    %v875 = vsel %vm862, %v873, 0
    %877 = vmatpush.msra.mxu0 0.0
    %878 = vmatpush.msra.mxu0 0.0
    %879 = vmatpush.msra.mxu0 0.0
    %880 = vmatpush.msra.mxu0 0.0
    %881 = vmatpush.msra.mxu0 0.0
    %882 = vmatpush.msra.mxu0 0.0
    %883 = vmatpush.msra.mxu0 0.0
    %884 = vmatpush.msra.mxu0 0.0
    %885 = vmatpush.msra.mxu0 0.0
    %886 = vmatpush.msra.mxu0 0.0
    %887 = vmatpush.msra.mxu0 0.0
    %888 = vmatpush.msra.mxu0 0.0
    %889 = vmatpush.msra.mxu0 0.0
    %890 = vmatpush.msra.mxu0 0.0
    %891 = vmatpush.msra.mxu0 0.0
    %892 = vmatpush.msra.mxu0 %v835
    %893 = vmatmul.f32.gmra.mxu0 %v875
    %v894 = vpop.f32.mrf.mxu0
    %v895 = vadd.f32 0.0, %v894
    %896 = vdwg.mxu0
    %s897 = sld [smem:[#allocation12]]
    %v898 = vstv %s897
    %v899 = vmul.f32 %v898, %v895
    %s900 = sld [smem:[#allocation13]]
    %v901 = vstv %s900
    %v902 = vadd.f32 %v899, %v901
    %s903 = sld [smem:[#allocation12 + $0x1]]
    %v904 = vstv %s903
    %v905 = vmul.f32 %v904, %v895
    %s906 = sld [smem:[#allocation13 + $0x1]]
    %v907 = vstv %s906
    %v908 = vadd.f32 %v905, %v907
    %v910 = vsel %vm432, %v715, 0
    %v913 = vsel %vm432, %v716, 0
    %915 = vmatpush.msra.mxu0 0.0
    %916 = vmatpush.msra.mxu0 0.0
    %917 = vmatpush.msra.mxu0 0.0
    %918 = vmatpush.msra.mxu0 0.0
    %919 = vmatpush.msra.mxu0 0.0
    %920 = vmatpush.msra.mxu0 0.0
    %921 = vmatpush.msra.mxu0 0.0
    %922 = vmatpush.msra.mxu0 0.0
    %923 = vmatpush.msra.mxu0 0.0
    %924 = vmatpush.msra.mxu0 0.0
    %925 = vmatpush.msra.mxu0 0.0
    %926 = vmatpush.msra.mxu0 0.0
    %927 = vmatpush.msra.mxu0 0.0
    %928 = vmatpush.msra.mxu0 0.0
    %929 = vmatpush.msra.mxu0 %v801
    %930 = vmatpush.msra.mxu0 %v798
    %931 = vmatmul.f32.gmra.mxu0 %v910
    %v932 = vpop.f32.mrf.mxu0
    %v933 = vadd.f32 %v902, %v932
    %934 = vmatmul.f32.gmra.mxu0 %v913
    %v935 = vpop.f32.mrf.mxu0
    %v936 = vadd.f32 %v908, %v935
    %937 = vdwg.mxu0
    %v938 = vmul.f32 %v933, %v593
    %v939 = vmul.f32 %v936, %v594
    %940 = vst.msk [vmem:[#allocation15] sm:$0xff] %vm132, %v938
    %941 = vst.msk [vmem:[#allocation15 + $0x8] sm:$0xff] %vm132, %v939
    %v943 = vsel %vm132, %v640, 0
    %v946 = vsel %vm132, %v643, 0
    %v949 = vsel %vm132, %v675, 0
    %v952 = vsel %vm132, %v678, 0
    %954 = vmatpush.xpose.msra.mxu0 0.0
    %955 = vmatpush.xpose.msra.mxu0 0.0
    %956 = vmatpush.xpose.msra.mxu0 0.0
    %957 = vmatpush.xpose.msra.mxu0 0.0
    %958 = vmatpush.xpose.msra.mxu0 0.0
    %959 = vmatpush.xpose.msra.mxu0 0.0
    %960 = vmatpush.xpose.msra.mxu0 0.0
    %961 = vmatpush.xpose.msra.mxu0 0.0
    %962 = vmatpush.xpose.msra.mxu0 0.0
    %963 = vmatpush.xpose.msra.mxu0 0.0
    %964 = vmatpush.xpose.msra.mxu0 0.0
    %965 = vmatpush.xpose.msra.mxu0 0.0
    %966 = vmatpush.xpose.msra.mxu0 0.0
    %967 = vmatpush.xpose.msra.mxu0 0.0
    %968 = vmatpush.xpose.msra.mxu0 %v952
    %969 = vmatpush.xpose.msra.mxu0 %v949
    %970 = vmatmul.f32.gmra.mxu0 %v943
    %v971 = vpop.f32.mrf.mxu0
    %v972 = vadd.f32 0.0, %v971
    %973 = vmatmul.f32.gmra.mxu0 %v946
    %v974 = vpop.f32.mrf.mxu0
    %v975 = vadd.f32 0.0, %v974
    %976 = vdwg.mxu0
    %v977 = vsel %vm432, %v972, -inf
    %978 = vmax.xlane.f32.xlu0 %v977
    %v979 = vpop.xlane.xlu0 %978
    %v980 = vsel %vm432, %v975, -inf
    %981 = vmax.xlane.f32.xlu0 %v980
    %v982 = vpop.xlane.xlu0 %981
    %v983 = vsub.f32 %v972, %v979
    %v984 = vsub.f32 %v975, %v982
    %v985 = vmul.f32 %v983, 1.442695
    %v986 = vpow.pop %v985
    %v987 = vmul.f32 %v984, 1.442695
    %v988 = vpow.pop %v987
    %v989 = vsel %vm432, %v986, 0.0
    %990 = vadd.xlane.f32.xlu0 %v989
    %v991 = vpop.xlane.xlu0 %990
    %v992 = vsel %vm432, %v988, 0.0
    %993 = vadd.xlane.f32.xlu0 %v992
    %v994 = vpop.xlane.xlu0 %993
    %v995 = vrcp.pop %v991
    %v996 = vrcp.pop %v994
    %v997 = vmul.f32 %v986, %v995
    %v998 = vmul.f32 %v988, %v996
    %v1000 = vsel %vm432, %v997, 0
    %v1003 = vsel %vm432, %v998, 0
    %1005 = vmatpush.msra.mxu0 0.0
    %1006 = vmatpush.msra.mxu0 0.0
    %1007 = vmatpush.msra.mxu0 0.0
    %1008 = vmatpush.msra.mxu0 0.0
    %1009 = vmatpush.msra.mxu0 0.0
    %1010 = vmatpush.msra.mxu0 0.0
    %1011 = vmatpush.msra.mxu0 0.0
    %1012 = vmatpush.msra.mxu0 0.0
    %1013 = vmatpush.msra.mxu0 0.0
    %1014 = vmatpush.msra.mxu0 0.0
    %1015 = vmatpush.msra.mxu0 0.0
    %1016 = vmatpush.msra.mxu0 0.0
    %1017 = vmatpush.msra.mxu0 0.0
    %1018 = vmatpush.msra.mxu0 0.0
    %1019 = vmatpush.msra.mxu0 %v713
    %1020 = vmatpush.msra.mxu0 %v710
    %1021 = vmatmul.f32.gmra.mxu0 %v1000
    %v1022 = vpop.f32.mrf.mxu0
    %v1023 = vadd.f32 0.0, %v1022
    %1024 = vmatmul.f32.gmra.mxu0 %v1003
    %v1025 = vpop.f32.mrf.mxu0
    %v1026 = vadd.f32 0.0, %v1025
    %1027 = vdwg.mxu0
    %s1028 = sld [smem:[#allocation9]]
    %v1029 = vstv %s1028
    %v1030 = vmul.f32 %v1029, %v596
    %v1031 = vadd.f32 %v1030, 0.0
    %s1032 = sld [smem:[#allocation9 + $0x1]]
    %v1033 = vstv %s1032
    %v1034 = vmul.f32 %v1033, %v597
    %v1035 = vadd.f32 %v1031, %v1034
    %s1036 = sld [smem:[#allocation10]]
    %v1037 = vstv %s1036
    %v1038 = vadd.f32 %v1035, %v1037
    %s1039 = sld [smem:[#allocation9 + $0x80]]
    %v1040 = vstv %s1039
    %v1041 = vmul.f32 %v1040, %v596
    %v1042 = vadd.f32 %v1041, 0.0
    %s1043 = sld [smem:[#allocation9 + $0x81]]
    %v1044 = vstv %s1043
    %v1045 = vmul.f32 %v1044, %v597
    %v1046 = vadd.f32 %v1042, %v1045
    %s1047 = sld [smem:[#allocation10 + $0x1]]
    %v1048 = vstv %s1047
    %v1049 = vadd.f32 %v1046, %v1048
    %s1050 = sld [smem:[#allocation9 + $0x100]]
    %v1051 = vstv %s1050
    %v1052 = vmul.f32 %v1051, %v596
    %v1053 = vadd.f32 %v1052, 0.0
    %s1054 = sld [smem:[#allocation9 + $0x101]]
    %v1055 = vstv %s1054
    %v1056 = vmul.f32 %v1055, %v597
    %v1057 = vadd.f32 %v1053, %v1056
    %s1058 = sld [smem:[#allocation10 + $0x2]]
    %v1059 = vstv %s1058
    %v1060 = vadd.f32 %v1057, %v1059
    %v1062 = vsel %vm132, %v1038, 0
    %v1065 = vsel %vm132, %v1049, 0
    %1067 = vmatpush.xpose.msra.mxu0 0.0
    %1068 = vmatpush.xpose.msra.mxu0 0.0
    %1069 = vmatpush.xpose.msra.mxu0 0.0
    %1070 = vmatpush.xpose.msra.mxu0 0.0
    %1071 = vmatpush.xpose.msra.mxu0 0.0
    %1072 = vmatpush.xpose.msra.mxu0 0.0
    %1073 = vmatpush.xpose.msra.mxu0 0.0
    %1074 = vmatpush.xpose.msra.mxu0 0.0
    %1075 = vmatpush.xpose.msra.mxu0 0.0
    %1076 = vmatpush.xpose.msra.mxu0 0.0
    %1077 = vmatpush.xpose.msra.mxu0 0.0
    %1078 = vmatpush.xpose.msra.mxu0 0.0
    %1079 = vmatpush.xpose.msra.mxu0 0.0
    %1080 = vmatpush.xpose.msra.mxu0 0.0
    %1081 = vmatpush.xpose.msra.mxu0 0.0
    %1082 = vmatpush.xpose.msra.mxu0 %v1065
    %1083 = vmatmul.f32.gmra.mxu0 %v1062
    %v1084 = vpop.f32.mrf.mxu0
    %v1085 = vadd.f32 0.0, %v1084
    %1086 = vdwg.mxu0
    %v1087 = vsel %vm862, %v1085, -inf
    %1088 = vmax.xlane.f32.xlu0 %v1087
    %v1089 = vpop.xlane.xlu0 %1088
    %v1090 = vsub.f32 %v1085, %v1089
    %v1091 = vmul.f32 %v1090, 1.442695
    %v1092 = vpow.pop %v1091
    %v1093 = vsel %vm862, %v1092, 0.0
    %1094 = vadd.xlane.f32.xlu0 %v1093
    %v1095 = vpop.xlane.xlu0 %1094
    %v1096 = vrcp.pop %v1095
    %v1097 = vmul.f32 %v1092, %v1096
    %v1099 = vsel %vm862, %v1097, 0
    %1101 = vmatpush.msra.mxu0 0.0
    %1102 = vmatpush.msra.mxu0 0.0
    %1103 = vmatpush.msra.mxu0 0.0
    %1104 = vmatpush.msra.mxu0 0.0
    %1105 = vmatpush.msra.mxu0 0.0
    %1106 = vmatpush.msra.mxu0 0.0
    %1107 = vmatpush.msra.mxu0 0.0
    %1108 = vmatpush.msra.mxu0 0.0
    %1109 = vmatpush.msra.mxu0 0.0
    %1110 = vmatpush.msra.mxu0 0.0
    %1111 = vmatpush.msra.mxu0 0.0
    %1112 = vmatpush.msra.mxu0 0.0
    %1113 = vmatpush.msra.mxu0 0.0
    %1114 = vmatpush.msra.mxu0 0.0
    %1115 = vmatpush.msra.mxu0 0.0
    %1116 = vmatpush.msra.mxu0 %v1060
    %1117 = vmatmul.f32.gmra.mxu0 %v1099
    %v1118 = vpop.f32.mrf.mxu0
    %v1119 = vadd.f32 0.0, %v1118
    %1120 = vdwg.mxu0
    %s1121 = sld [smem:[#allocation12]]
    %v1122 = vstv %s1121
    %v1123 = vmul.f32 %v1122, %v1119
    %s1124 = sld [smem:[#allocation13]]
    %v1125 = vstv %s1124
    %v1126 = vadd.f32 %v1123, %v1125
    %s1127 = sld [smem:[#allocation12 + $0x1]]
    %v1128 = vstv %s1127
    %v1129 = vmul.f32 %v1128, %v1119
    %s1130 = sld [smem:[#allocation13 + $0x1]]
    %v1131 = vstv %s1130
    %v1132 = vadd.f32 %v1129, %v1131
    %1133 = vmatpush.msra.mxu0 0.0
    %1134 = vmatpush.msra.mxu0 0.0
    %1135 = vmatpush.msra.mxu0 0.0
    %1136 = vmatpush.msra.mxu0 0.0
    %1137 = vmatpush.msra.mxu0 0.0
    %1138 = vmatpush.msra.mxu0 0.0
    %1139 = vmatpush.msra.mxu0 0.0
    %1140 = vmatpush.msra.mxu0 0.0
    %1141 = vmatpush.msra.mxu0 0.0
    %1142 = vmatpush.msra.mxu0 0.0
    %1143 = vmatpush.msra.mxu0 0.0
    %1144 = vmatpush.msra.mxu0 0.0
    %1145 = vmatpush.msra.mxu0 0.0
    %1146 = vmatpush.msra.mxu0 0.0
    %1147 = vmatpush.msra.mxu0 %v1026
    %1148 = vmatpush.msra.mxu0 %v1023
    %1149 = vmatmul.f32.gmra.mxu0 %v910
    %v1150 = vpop.f32.mrf.mxu0
    %v1151 = vadd.f32 %v1126, %v1150
    %1152 = vmatmul.f32.gmra.mxu0 %v913
    %v1153 = vpop.f32.mrf.mxu0
    %v1154 = vadd.f32 %v1132, %v1153
    %1155 = vdwg.mxu0
    %v1156 = vmul.f32 %v1151, %v596
    %v1157 = vmul.f32 %v1154, %v597
    %s1158 = scalar_lea.vmem [#allocation15], 16
    %1159 = vst.msk [vmem:[%s1158] sm:$0xff] %vm132, %v1156
    %1160 = vst.msk [vmem:[%s1158 + $0x8] sm:$0xff] %vm132, %v1157
    // Predicated region
    $region74: #{block_cs_ann_forward.1} parent=1 // pred_check
      _
    $region75: #{block_cs_ann_forward.1} parent=1 // pred_check_branch
      %1162 = sbr.rel (0) target = $region77
    $region76: #{block_cs_ann_forward.1} parent=1 // pred_region
      %1164 = vsyncadd [#allocation4], 0
      %s1165 = sshll.u32 [#allocation15], 4
      %s1166 = int_to_ptr.vmem [resolvable:$true] %s1165
      %s1167 = sshll.u32 %s11, 4
      %s1168 = int_to_ptr.hbm [resolvable:$true] %s1167
      %1173 = dma.vmem_to_hbm [thread:$0]  %s1166, 512, %s1168, [#allocation4], 128, 128, 8
    $region77: #{block_cs_ann_forward.1} parent=1 // pred_fallthru
      _
    // Predicated region
    $region78: #{block_cs_ann_forward.1} parent=1 // pred_check
      _
    $region79: #{block_cs_ann_forward.1} parent=1 // pred_check_branch
      %1175 = sbr.rel (0) target = $region81
    $region80: #{block_cs_ann_forward.1} parent=1 // pred_region
      %1177 = dma.done [#allocation4], 512
    $region81: #{block_cs_ann_forward.1} parent=1 // pred_fallthru
      _
    %1178 = vsyncpa [#allocation3], 1
    %1179 = vsyncpa [#allocation4], 1
    %1180 = vsyncpa [#allocation5], 1
    %1181 = vsyncpa [#allocation7], 1
    %1182 = vsyncpa [#allocation11], 1
    %1183 = vsyncpa [#allocation14], 1

</llo_original>
